<compile_context>
chip_gen: v7x
topology: tpu7x:2x2x1
jax: 0.10.0
libtpu: 0.0.40
codegen_flags: <defaults>
</compile_context>

<pallas_src>
import functools

import jax
import jax.numpy as jnp
from jax import lax
from jax.experimental import pallas as pl
from jax.experimental.pallas import tpu as pltpu


# ---------------------------------------------------------------------------
# Pallas kernel: recurrent part of one ConvLSTM layer (grid = (batch_blocks, L))
# ---------------------------------------------------------------------------
def _convlstm_layer_kernel(xz_ref, whT_ref, mask_ref,        # inputs
                           out_ref, hn_ref, cn_ref,          # outputs
                           h_scr, c_scr,                     # scratch (persist over t)
                           *, Hid, KH, KW, W, ph, pw, BHW):
    t = pl.program_id(1)

    @pl.when(t == 0)
    def _():
        h_scr[...] = jnp.zeros_like(h_scr)
        c_scr[...] = jnp.zeros_like(c_scr)

    h = h_scr[...]                    # (Hid, BHW) f32, pixels on lanes
    m_all = mask_ref[...]             # (KH*KW, BHW) f32 border-validity masks

    # Build the fused h-conv LHS: for tap (dy,dx) the contribution at pixel p comes
    # from pixel p + (dy-ph)*W + (dx-pw); implement the shift as a lane roll and zero
    # the out-of-image positions with the precomputed mask.
    parts = []
    for dy in range(KH):
        for dx in range(KW):
            tap = dy * KW + dx
            off = (dy - ph) * W + (dx - pw)
            if off == 0:
                parts.append(h)                                   # center tap: no shift, all valid
            else:
                shifted = pltpu.roll(h, (-off) % BHW, axis=1)     # out[p] = h[p + off]
                parts.append(shifted * m_all[tap:tap + 1, :])

    lhs = jnp.concatenate(parts, axis=0).astype(jnp.bfloat16)    # (KH*KW*Hid, BHW)

    # One bf16 MXU matmul for all taps & gates, f32 accumulation, plus the hoisted
    # input projection (already contains the bias).
    gates = jnp.dot(whT_ref[...], lhs,
                    preferred_element_type=jnp.float32) + xz_ref[0, 0]   # (4*Hid, BHW)

    i = jax.nn.sigmoid(gates[0 * Hid:1 * Hid, :])
    f = jax.nn.sigmoid(gates[1 * Hid:2 * Hid, :])
    o = jax.nn.sigmoid(gates[2 * Hid:3 * Hid, :])
    g = jnp.tanh(gates[3 * Hid:4 * Hid, :])

    c_new = f * c_scr[...] + i * g
    h_new = o * jnp.tanh(c_new)

    c_scr[...] = c_new
    h_scr[...] = h_new
    out_ref[0, 0] = h_new.astype(out_ref.dtype)                  # lane-dense (Hid, BHW)

    @pl.when(t == pl.num_programs(1) - 1)
    def _():
        hn_ref[0] = h_new.astype(hn_ref.dtype)
        cn_ref[0] = c_new.astype(cn_ref.dtype)


def convlstm_layer_pallas(x_seq, wx, wh, b, *, num_batch_blocks=None):
    """One ConvLSTM layer over the full sequence.

    x_seq: (L, N, H, W, Cin) f32
    wx:    (KH, KW, Cin, 4*Hid)  conv weight slice acting on the input
    wh:    (KH, KW, Hid, 4*Hid)  conv weight slice acting on the hidden state
    b:     (4*Hid,)
    returns (out (L,N,H,W,Hid), h_n (N,Hid,H,W), c_n (N,Hid,H,W))
    """
    L, N, H, W, Cin = x_seq.shape
    KH, KW, _, C4 = wx.shape
    Hid = C4 // 4
    assert KH % 2 == 1 and KW % 2 == 1, "even kernel sizes need asymmetric SAME pad (unsupported)"
    ph, pw = KH // 2, KW // 2
    # TODO(synk): general H*W needs lane-padding of the flattened pixel axis.
    assert (H * W) % 128 == 0, "H*W must be a multiple of 128 for the lane-dense pixel layout"

    if num_batch_blocks is None:
        num_batch_blocks = 2 if (N % 2 == 0 and N >= 2) else 1   # feed both TCs on v7x
    NB = num_batch_blocks
    assert N % NB == 0
    bs = N // NB
    BHW = bs * H * W
    K = KH * KW * Hid

    # ---- hoisted input projection: one big conv over the whole sequence (outside the
    #      serial time loop), includes the bias.
    z = lax.conv_general_dilated(
        x_seq.reshape(L * N, H, W, Cin), wx, (1, 1), "SAME",
        dimension_numbers=("NHWC", "HWIO", "NHWC"),
        precision=lax.Precision.HIGHEST)
    z = (z + b.reshape(1, 1, 1, C4)).reshape(L, N, H, W, C4)
    # -> (NB, L, 4*Hid, bs*H*W) with pixel index p = n_local*H*W + y*W + x
    xz = (z.reshape(L, NB, bs, H, W, C4)
           .transpose(1, 0, 5, 2, 3, 4)
           .reshape(NB, L, C4, BHW))

    # ---- fused, transposed hidden->gates weight (4*Hid, KH*KW*Hid), bf16 for the MXU
    whT = jnp.transpose(wh.reshape(K, C4)).astype(jnp.bfloat16)

    # ---- per-tap validity masks for the roll-based 'same' padding of the h-conv
    p_idx = jnp.arange(BHW)
    yy = (p_idx // W) % H
    xx = p_idx % W
    rows = []
    for dy in range(KH):
        for dx in range(KW):
            rows.append((yy + dy - ph >= 0) & (yy + dy - ph < H) &
                        (xx + dx - pw >= 0) & (xx + dx - pw < W))
    masks = jnp.stack(rows, axis=0).astype(jnp.float32)          # (KH*KW, BHW)

    kern = functools.partial(_convlstm_layer_kernel,
                             Hid=Hid, KH=KH, KW=KW, W=W, ph=ph, pw=pw, BHW=BHW)

    out, hn, cn = pl.pallas_call(
        kern,
        out_shape=(jax.ShapeDtypeStruct((NB, L, Hid, BHW), jnp.float32),
                   jax.ShapeDtypeStruct((NB, Hid, BHW), jnp.float32),
                   jax.ShapeDtypeStruct((NB, Hid, BHW), jnp.float32)),
        grid_spec=pltpu.PrefetchScalarGridSpec(
            num_scalar_prefetch=0,
            grid=(NB, L),
            in_specs=[
                pl.BlockSpec((1, 1, C4, BHW), lambda nb, t: (nb, t, 0, 0)),  # x projection
                pl.BlockSpec((C4, K), lambda nb, t: (0, 0)),                 # fused Wh^T (resident)
                pl.BlockSpec((KH * KW, BHW), lambda nb, t: (0, 0)),          # tap masks (resident)
            ],
            out_specs=[
                pl.BlockSpec((1, 1, Hid, BHW), lambda nb, t: (nb, t, 0, 0)),
                pl.BlockSpec((1, Hid, BHW), lambda nb, t: (nb, 0, 0)),       # h_n (written at t=L-1)
                pl.BlockSpec((1, Hid, BHW), lambda nb, t: (nb, 0, 0)),       # c_n (written at t=L-1)
            ],
            scratch_shapes=[
                pltpu.VMEM((Hid, BHW), jnp.float32),   # recurrent h state
                pltpu.VMEM((Hid, BHW), jnp.float32),   # recurrent c state
            ]),
        compiler_params=pltpu.CompilerParams(
            dimension_semantics=("parallel", "arbitrary"),   # batch blocks ||, time serial
            vmem_limit_bytes=32 * 1024 * 1024),              # explicit budget; footprint ~1 MiB here
    )(xz, whT, masks)

    # wrapper-side layout plumbing back to NHWC / NCHW
    out_nhwc = (out.reshape(NB, L, Hid, bs, H, W)
                   .transpose(1, 0, 3, 4, 5, 2)
                   .reshape(L, N, H, W, Hid))
    hn_nchw = hn.reshape(NB, Hid, bs, H, W).transpose(0, 2, 1, 3, 4).reshape(N, Hid, H, W)
    cn_nchw = cn.reshape(NB, Hid, bs, H, W).transpose(0, 2, 1, 3, 4).reshape(N, Hid, H, W)
    return out_nhwc, hn_nchw, cn_nchw


# ---------------------------------------------------------------------------
# Parameter construction (mirrors nn.Conv2d shapes / init per layer)
# ---------------------------------------------------------------------------
def init_convlstm_params(key, input_size, hidden_sizes, kernel_sizes, bias=True):
    params = []
    for i, (hid, (kh, kw)) in enumerate(zip(hidden_sizes, kernel_sizes)):
        cin = input_size if i == 0 else hidden_sizes[i - 1]
        ctot = cin + hid
        key, k1, k2 = jax.random.split(key, 3)
        fan_in = ctot * kh * kw
        bound = 1.0 / jnp.sqrt(fan_in)
        # PyTorch conv weight shape: (4*hid, cin+hid, kh, kw); gate order i, f, o, g
        w_pt = jax.random.uniform(k1, (4 * hid, ctot, kh, kw), jnp.float32, -bound, bound)
        b_pt = (jax.random.uniform(k2, (4 * hid,), jnp.float32, -bound, bound)
                if bias else jnp.zeros((4 * hid,), jnp.float32))
        w_hwio = jnp.transpose(w_pt, (2, 3, 1, 0))        # (kh, kw, ctot, 4*hid)
        params.append({"wx": w_hwio[:, :, :cin, :], "wh": w_hwio[:, :, cin:, :], "b": b_pt})
    return params


# ---------------------------------------------------------------------------
# Full ConvLSTM forward (matches the PyTorch module's forward semantics)
# ---------------------------------------------------------------------------
def convlstm_forward(x, params, batch_first=True):
    """x: (N, L, C, H, W) if batch_first else (L, N, C, H, W).
    Returns (layer_output (N, L, Hid, H, W), (h_n (N,Hid,H,W), c_n (N,Hid,H,W)))."""
    if not batch_first:
        x = jnp.transpose(x, (1, 0, 2, 3, 4))
    x_seq = jnp.transpose(x, (1, 0, 3, 4, 2)).astype(jnp.float32)  # (L, N, H, W, C)

    cur = x_seq
    h_n = c_n = None
    for p in params:
        cur, h_n, c_n = convlstm_layer_pallas(cur, p["wx"], p["wh"], p["b"])
        # TODO(synk): inter-layer Dropout is identity here (eval-mode / p=0).

    layer_output = jnp.transpose(cur, (1, 0, 4, 2, 3))   # (N, L, Hid, H, W)
    return layer_output, (h_n, c_n)


# ---------------------------------------------------------------------------
# Pure-JAX f32 reference (for correctness validation)
# ---------------------------------------------------------------------------
def _ref_layer(x_seq, wx, wh, b):
    L, N, H, W, Cin = x_seq.shape
    KH, KW, _, Hid4 = wx.shape
    Hid = Hid4 // 4
    w = jnp.concatenate([wx, wh], axis=2)                 # HWIO
    h = jnp.zeros((N, H, W, Hid), jnp.float32)
    c = jnp.zeros_like(h)
    outs = []
    for t in range(L):
        comb = jnp.concatenate([x_seq[t], h], axis=-1)
        cc = lax.conv_general_dilated(
            comb, w, (1, 1), "SAME",
            dimension_numbers=("NHWC", "HWIO", "NHWC"),
            precision=lax.Precision.HIGHEST) + b.reshape(1, 1, 1, Hid4)
        i = jax.nn.sigmoid(cc[..., :Hid])
        f = jax.nn.sigmoid(cc[..., Hid:2 * Hid])
        o = jax.nn.sigmoid(cc[..., 2 * Hid:3 * Hid])
        g = jnp.tanh(cc[..., 3 * Hid:])
        c = f * c + i * g
        h = o * jnp.tanh(c)
        outs.append(h)
    return jnp.stack(outs, axis=0), h, c


def _ref_forward(x, params):
    x_seq = jnp.transpose(x, (1, 0, 3, 4, 2)).astype(jnp.float32)
    cur = x_seq
    h = c = None
    for p in params:
        cur, h, c = _ref_layer(cur, p["wx"], p["wh"], p["b"])
    return (jnp.transpose(cur, (1, 0, 4, 2, 3)),
            (jnp.transpose(h, (0, 3, 1, 2)), jnp.transpose(c, (0, 3, 1, 2))))


# ---------------------------------------------------------------------------
if __name__ == "__main__":
    # module config: ConvLSTM(input_size=4, hidden_size=32, kernel_size=(3,3),
    #                         num_layers=2, batch_first=True, dropout=0.0, bias=True)
    N, L, Cin, H, W = 2, 8, 4, 16, 16
    hidden_sizes = [32, 32]
    kernel_sizes = [(3, 3), (3, 3)]

    key = jax.random.PRNGKey(0)
    kx, kp = jax.random.split(key)
    x = jax.random.normal(kx, (N, L, Cin, H, W), jnp.float32)
    params = init_convlstm_params(kp, Cin, hidden_sizes, kernel_sizes, bias=True)

    out, (h_n, c_n) = convlstm_forward(x, params, batch_first=True)
    jax.block_until_ready((out, h_n, c_n))

    # sanity-check against the pure-f32 JAX reference (kernel uses bf16 MXU operands
    # for the recurrent h-conv, hence the loosened-but-still-discriminating tolerance)
    out_r, (h_r, c_r) = _ref_forward(x, params)
    assert out.shape == (N, L, hidden_sizes[-1], H, W)
    assert h_n.shape == (N, hidden_sizes[-1], H, W)
    assert c_n.shape == (N, hidden_sizes[-1], H, W)
    assert jnp.allclose(out, out_r, atol=3e-2, rtol=3e-2)
    assert jnp.allclose(h_n, h_r, atol=3e-2, rtol=3e-2)
    assert jnp.allclose(c_n, c_r, atol=3e-2, rtol=3e-2)

    print("KERNEL_OK")
</pallas_src>

<mosaic_0001>
module attributes {stable_mosaic.version = 11 : i64} {
  func.func @_convlstm_layer_kernel(%arg0: i32, %arg1: i32, %arg2: memref<1x1x128x256xf32, #tpu.memory_space<vmem>>, %arg3: memref<128x288xbf16, #tpu.memory_space<vmem>>, %arg4: memref<9x256xf32, #tpu.memory_space<vmem>>, %arg5: memref<1x1x32x256xf32, #tpu.memory_space<vmem>>, %arg6: memref<1x32x256xf32, #tpu.memory_space<vmem>>, %arg7: memref<1x32x256xf32, #tpu.memory_space<vmem>>, %arg8: memref<32x256xf32, #tpu.memory_space<vmem>>, %arg9: memref<32x256xf32, #tpu.memory_space<vmem>>) attributes {dimension_semantics = [#tpu.dimension_semantics<parallel>, #tpu.dimension_semantics<arbitrary>], iteration_bounds = array<i64: 2, 8>, scalar_prefetch = 0 : i64, scratch_operands = 2 : i64, tpu.core_type = #tpu.core_type<tc>, window_params = [{transform_indices = @transform_0, window_bounds = array<i64: 1, 1, 128, 256>}, {pipeline_mode = #tpu.pipeline_mode<synchronous>, transform_indices = @transform_1, window_bounds = array<i64: 128, 288>}, {pipeline_mode = #tpu.pipeline_mode<synchronous>, transform_indices = @transform_2, window_bounds = array<i64: 9, 256>}, {transform_indices = @transform_3, window_bounds = array<i64: 1, 1, 32, 256>}, {transform_indices = @transform_4, window_bounds = array<i64: 1, 32, 256>}, {transform_indices = @transform_5, window_bounds = array<i64: 1, 32, 256>}]} {
    %c0_i32 = arith.constant 0 : i32
    %0 = arith.cmpi eq, %arg1, %c0_i32 : i32
    %1 = arith.extui %0 : i1 to i32
    %c0_i32_0 = arith.constant 0 : i32
    %2 = arith.cmpi ne, %1, %c0_i32_0 : i32
    scf.if %2 {
      %cst_24 = arith.constant 0.000000e+00 : f32
      %78 = vector.broadcast %cst_24 : f32 to vector<32x256xf32>
      %c0_25 = arith.constant 0 : index
      %c0_26 = arith.constant 0 : index
      %79 = vector.load %arg8[%c0_25, %c0_26] : memref<32x256xf32, #tpu.memory_space<vmem>>, vector<32x256xf32>
      tpu.vector_store %arg8[%c0_25, %c0_26], %78 {strides = array<i32>} : memref<32x256xf32, #tpu.memory_space<vmem>>, vector<32x256xf32>,
      %cst_27 = arith.constant 0.000000e+00 : f32
      %80 = vector.broadcast %cst_27 : f32 to vector<32x256xf32>
      %c0_28 = arith.constant 0 : index
      %c0_29 = arith.constant 0 : index
      %81 = vector.load %arg9[%c0_28, %c0_29] : memref<32x256xf32, #tpu.memory_space<vmem>>, vector<32x256xf32>
      tpu.vector_store %arg9[%c0_28, %c0_29], %80 {strides = array<i32>} : memref<32x256xf32, #tpu.memory_space<vmem>>, vector<32x256xf32>,
    } else {
    }
    %c0 = arith.constant 0 : index
    %c0_1 = arith.constant 0 : index
    %3 = vector.load %arg8[%c0, %c0_1] : memref<32x256xf32, #tpu.memory_space<vmem>>, vector<32x256xf32>
    %c0_2 = arith.constant 0 : index
    %c0_3 = arith.constant 0 : index
    %4 = vector.load %arg4[%c0_2, %c0_3] : memref<9x256xf32, #tpu.memory_space<vmem>>, vector<9x256xf32>
    %c17_i32 = arith.constant 17 : i32
    %5 = tpu.dynamic_rotate %3 by %c17_i32 dim 1 : vector<32x256xf32>, i32 -> vector<32x256xf32>
    %6 = vector.extract_strided_slice %4 {offsets = [0, 0], sizes = [1, 256], strides = [1, 1]} : vector<9x256xf32> to vector<1x256xf32>
    %7 = vector.broadcast %6 : vector<1x256xf32> to vector<32x256xf32>
    %8 = arith.mulf %5, %7 : vector<32x256xf32>
    %c16_i32 = arith.constant 16 : i32
    %9 = tpu.dynamic_rotate %3 by %c16_i32 dim 1 : vector<32x256xf32>, i32 -> vector<32x256xf32>
    %10 = vector.extract_strided_slice %4 {offsets = [1, 0], sizes = [1, 256], strides = [1, 1]} : vector<9x256xf32> to vector<1x256xf32>
    %11 = vector.broadcast %10 : vector<1x256xf32> to vector<32x256xf32>
    %12 = arith.mulf %9, %11 : vector<32x256xf32>
    %c15_i32 = arith.constant 15 : i32
    %13 = tpu.dynamic_rotate %3 by %c15_i32 dim 1 : vector<32x256xf32>, i32 -> vector<32x256xf32>
    %14 = vector.extract_strided_slice %4 {offsets = [2, 0], sizes = [1, 256], strides = [1, 1]} : vector<9x256xf32> to vector<1x256xf32>
    %15 = vector.broadcast %14 : vector<1x256xf32> to vector<32x256xf32>
    %16 = arith.mulf %13, %15 : vector<32x256xf32>
    %c1_i32 = arith.constant 1 : i32
    %17 = tpu.dynamic_rotate %3 by %c1_i32 dim 1 : vector<32x256xf32>, i32 -> vector<32x256xf32>
    %18 = vector.extract_strided_slice %4 {offsets = [3, 0], sizes = [1, 256], strides = [1, 1]} : vector<9x256xf32> to vector<1x256xf32>
    %19 = vector.broadcast %18 : vector<1x256xf32> to vector<32x256xf32>
    %20 = arith.mulf %17, %19 : vector<32x256xf32>
    %c255_i32 = arith.constant 255 : i32
    %21 = tpu.dynamic_rotate %3 by %c255_i32 dim 1 : vector<32x256xf32>, i32 -> vector<32x256xf32>
    %22 = vector.extract_strided_slice %4 {offsets = [5, 0], sizes = [1, 256], strides = [1, 1]} : vector<9x256xf32> to vector<1x256xf32>
    %23 = vector.broadcast %22 : vector<1x256xf32> to vector<32x256xf32>
    %24 = arith.mulf %21, %23 : vector<32x256xf32>
    %c241_i32 = arith.constant 241 : i32
    %25 = tpu.dynamic_rotate %3 by %c241_i32 dim 1 : vector<32x256xf32>, i32 -> vector<32x256xf32>
    %26 = vector.extract_strided_slice %4 {offsets = [6, 0], sizes = [1, 256], strides = [1, 1]} : vector<9x256xf32> to vector<1x256xf32>
    %27 = vector.broadcast %26 : vector<1x256xf32> to vector<32x256xf32>
    %28 = arith.mulf %25, %27 : vector<32x256xf32>
    %c240_i32 = arith.constant 240 : i32
    %29 = tpu.dynamic_rotate %3 by %c240_i32 dim 1 : vector<32x256xf32>, i32 -> vector<32x256xf32>
    %30 = vector.extract_strided_slice %4 {offsets = [7, 0], sizes = [1, 256], strides = [1, 1]} : vector<9x256xf32> to vector<1x256xf32>
    %31 = vector.broadcast %30 : vector<1x256xf32> to vector<32x256xf32>
    %32 = arith.mulf %29, %31 : vector<32x256xf32>
    %c239_i32 = arith.constant 239 : i32
    %33 = tpu.dynamic_rotate %3 by %c239_i32 dim 1 : vector<32x256xf32>, i32 -> vector<32x256xf32>
    %34 = vector.extract_strided_slice %4 {offsets = [8, 0], sizes = [1, 256], strides = [1, 1]} : vector<9x256xf32> to vector<1x256xf32>
    %35 = vector.broadcast %34 : vector<1x256xf32> to vector<32x256xf32>
    %36 = arith.mulf %33, %35 : vector<32x256xf32>
    %37 = tpu.concatenate %8, %12, %16, %20, %3, %24, %28, %32, %36 in 0 : vector<32x256xf32>, vector<32x256xf32>, vector<32x256xf32>, vector<32x256xf32>, vector<32x256xf32>, vector<32x256xf32>, vector<32x256xf32>, vector<32x256xf32>, vector<32x256xf32> -> vector<288x256xf32>
    %38 = arith.truncf %37 : vector<288x256xf32> to vector<288x256xbf16>
    %c0_4 = arith.constant 0 : index
    %c0_5 = arith.constant 0 : index
    %39 = vector.load %arg3[%c0_4, %c0_5] : memref<128x288xbf16, #tpu.memory_space<vmem>>, vector<128x288xbf16>
    %cst = arith.constant dense<0.000000e+00> : vector<128x256xf32>
    %40 = tpu.matmul %39, %38, %cst {dimension_numbers = #tpu.dot_dimension_numbers<[1], [0], [0], [1], [0, 0, 1, 1], [], []>} : vector<128x288xbf16>, vector<288x256xbf16>, vector<128x256xf32> -> vector<128x256xf32>
    %c0_6 = arith.constant 0 : index
    %c0_7 = arith.constant 0 : index
    %c0_8 = arith.constant 0 : index
    %c0_9 = arith.constant 0 : index
    %41 = vector.load %arg2[%c0_6, %c0_7, %c0_8, %c0_9] : memref<1x1x128x256xf32, #tpu.memory_space<vmem>>, vector<1x1x128x256xf32>
    %42 = vector.shape_cast %41 : vector<1x1x128x256xf32> to vector<128x256xf32>
    %43 = arith.addf %40, %42 : vector<128x256xf32>
    %44 = vector.extract_strided_slice %43 {offsets = [0, 0], sizes = [32, 256], strides = [1, 1]} : vector<128x256xf32> to vector<32x256xf32>
    %45 = arith.negf %44 : vector<32x256xf32>
    %46 = math.exp %45 : vector<32x256xf32>
    %cst_10 = arith.constant 1.000000e+00 : f32
    %47 = vector.broadcast %cst_10 : f32 to vector<32x256xf32>
    %48 = arith.addf %47, %46 : vector<32x256xf32>
    %49 = arith.divf %47, %48 : vector<32x256xf32>
    %50 = vector.extract_strided_slice %43 {offsets = [32, 0], sizes = [32, 256], strides = [1, 1]} : vector<128x256xf32> to vector<32x256xf32>
    %51 = arith.negf %50 : vector<32x256xf32>
    %52 = math.exp %51 : vector<32x256xf32>
    %cst_11 = arith.constant 1.000000e+00 : f32
    %53 = vector.broadcast %cst_11 : f32 to vector<32x256xf32>
    %54 = arith.addf %53, %52 : vector<32x256xf32>
    %55 = arith.divf %53, %54 : vector<32x256xf32>
    %56 = vector.extract_strided_slice %43 {offsets = [64, 0], sizes = [32, 256], strides = [1, 1]} : vector<128x256xf32> to vector<32x256xf32>
    %57 = arith.negf %56 : vector<32x256xf32>
    %58 = math.exp %57 : vector<32x256xf32>
    %cst_12 = arith.constant 1.000000e+00 : f32
    %59 = vector.broadcast %cst_12 : f32 to vector<32x256xf32>
    %60 = arith.addf %59, %58 : vector<32x256xf32>
    %61 = arith.divf %59, %60 : vector<32x256xf32>
    %62 = vector.extract_strided_slice %43 {offsets = [96, 0], sizes = [32, 256], strides = [1, 1]} : vector<128x256xf32> to vector<32x256xf32>
    %63 = math.tanh %62 : vector<32x256xf32>
    %c0_13 = arith.constant 0 : index
    %c0_14 = arith.constant 0 : index
    %64 = vector.load %arg9[%c0_13, %c0_14] : memref<32x256xf32, #tpu.memory_space<vmem>>, vector<32x256xf32>
    %65 = arith.mulf %55, %64 : vector<32x256xf32>
    %66 = arith.mulf %49, %63 : vector<32x256xf32>
    %67 = arith.addf %65, %66 : vector<32x256xf32>
    %68 = math.tanh %67 : vector<32x256xf32>
    %69 = arith.mulf %61, %68 : vector<32x256xf32>
    %c0_15 = arith.constant 0 : index
    %c0_16 = arith.constant 0 : index
    %70 = vector.load %arg9[%c0_15, %c0_16] : memref<32x256xf32, #tpu.memory_space<vmem>>, vector<32x256xf32>
    tpu.vector_store %arg9[%c0_15, %c0_16], %67 {strides = array<i32>} : memref<32x256xf32, #tpu.memory_space<vmem>>, vector<32x256xf32>,
    %c0_17 = arith.constant 0 : index
    %c0_18 = arith.constant 0 : index
    %71 = vector.load %arg8[%c0_17, %c0_18] : memref<32x256xf32, #tpu.memory_space<vmem>>, vector<32x256xf32>
    tpu.vector_store %arg8[%c0_17, %c0_18], %69 {strides = array<i32>} : memref<32x256xf32, #tpu.memory_space<vmem>>, vector<32x256xf32>,
    %c0_19 = arith.constant 0 : index
    %c0_20 = arith.constant 0 : index
    %c0_21 = arith.constant 0 : index
    %c0_22 = arith.constant 0 : index
    %72 = vector.load %arg5[%c0_19, %c0_20, %c0_21, %c0_22] : memref<1x1x32x256xf32, #tpu.memory_space<vmem>>, vector<1x1x32x256xf32>
    %73 = vector.shape_cast %72 : vector<1x1x32x256xf32> to vector<32x256xf32>
    %74 = vector.shape_cast %69 : vector<32x256xf32> to vector<1x1x32x256xf32>
    tpu.vector_store %arg5[%c0_19, %c0_20, %c0_21, %c0_22], %74 {strides = array<i32>} : memref<1x1x32x256xf32, #tpu.memory_space<vmem>>, vector<1x1x32x256xf32>,
    %c7_i32 = arith.constant 7 : i32
    %75 = arith.cmpi eq, %arg1, %c7_i32 : i32
    %76 = arith.extui %75 : i1 to i32
    %c0_i32_23 = arith.constant 0 : i32
    %77 = arith.cmpi ne, %76, %c0_i32_23 : i32
    scf.if %77 {
      %c0_24 = arith.constant 0 : index
      %c0_25 = arith.constant 0 : index
      %c0_26 = arith.constant 0 : index
      %78 = vector.load %arg6[%c0_24, %c0_25, %c0_26] : memref<1x32x256xf32, #tpu.memory_space<vmem>>, vector<1x32x256xf32>
      %79 = vector.shape_cast %78 : vector<1x32x256xf32> to vector<32x256xf32>
      %80 = vector.shape_cast %69 : vector<32x256xf32> to vector<1x32x256xf32>
      tpu.vector_store %arg6[%c0_24, %c0_25, %c0_26], %80 {strides = array<i32>} : memref<1x32x256xf32, #tpu.memory_space<vmem>>, vector<1x32x256xf32>,
      %c0_27 = arith.constant 0 : index
      %c0_28 = arith.constant 0 : index
      %c0_29 = arith.constant 0 : index
      %81 = vector.load %arg7[%c0_27, %c0_28, %c0_29] : memref<1x32x256xf32, #tpu.memory_space<vmem>>, vector<1x32x256xf32>
      %82 = vector.shape_cast %81 : vector<1x32x256xf32> to vector<32x256xf32>
      %83 = vector.shape_cast %67 : vector<32x256xf32> to vector<1x32x256xf32>
      tpu.vector_store %arg7[%c0_27, %c0_28, %c0_29], %83 {strides = array<i32>} : memref<1x32x256xf32, #tpu.memory_space<vmem>>, vector<1x32x256xf32>,
    } else {
    }
    return
  }
  func.func @transform_0(%arg0: i32, %arg1: i32) -> (i32, i32, i32, i32) {
    %c0_i32 = arith.constant 0 : i32
    %c0_i32_0 = arith.constant 0 : i32
    %c0_i32_1 = arith.constant 0 : i32
    return %arg0, %arg1, %c0_i32, %c0_i32_0 : i32, i32, i32, i32
  }
  func.func @transform_1(%arg0: i32, %arg1: i32) -> (i32, i32) {
    %c0_i32 = arith.constant 0 : i32
    %c0_i32_0 = arith.constant 0 : i32
    %c0_i32_1 = arith.constant 0 : i32
    return %c0_i32, %c0_i32_0 : i32, i32
  }
  func.func @transform_2(%arg0: i32, %arg1: i32) -> (i32, i32) {
    %c0_i32 = arith.constant 0 : i32
    %c0_i32_0 = arith.constant 0 : i32
    %c0_i32_1 = arith.constant 0 : i32
    return %c0_i32, %c0_i32_0 : i32, i32
  }
  func.func @transform_3(%arg0: i32, %arg1: i32) -> (i32, i32, i32, i32) {
    %c0_i32 = arith.constant 0 : i32
    %c0_i32_0 = arith.constant 0 : i32
    %c0_i32_1 = arith.constant 0 : i32
    return %arg0, %arg1, %c0_i32, %c0_i32_0 : i32, i32, i32, i32
  }
  func.func @transform_4(%arg0: i32, %arg1: i32) -> (i32, i32, i32) {
    %c0_i32 = arith.constant 0 : i32
    %c0_i32_0 = arith.constant 0 : i32
    %c0_i32_1 = arith.constant 0 : i32
    return %arg0, %c0_i32, %c0_i32_0 : i32, i32, i32
  }
  func.func @transform_5(%arg0: i32, %arg1: i32) -> (i32, i32, i32) {
    %c0_i32 = arith.constant 0 : i32
    %c0_i32_0 = arith.constant 0 : i32
    %c0_i32_1 = arith.constant 0 : i32
    return %arg0, %c0_i32, %c0_i32_0 : i32, i32, i32
  }
}

</mosaic_0001>

<llo_original>
// kernel: tpu_custom_call.1
$region0: #{tpu_custom_call.1}
  #allocation0 [shape = 'u32[]', space=smem, size = 0x4, offset = 0x4, fixed_abs, tag = 'smem constant byte address 0x4 - core index']
  #allocation1 [shape = 'u32[144,128]{1,0:T(1,128)}', space=vmem, size = 0x12000, scoped, tag = 'internal scratch']
  #allocation2 [shape = 'f32[32,256]{1,0:T(8,128)}', space=vmem, size = 0x8000, scoped, tag = 'scratch operand']
  #allocation3 [shape = 'f32[32,256]{1,0:T(8,128)}', space=vmem, size = 0x8000, scoped, tag = 'scratch operand']
  %s0 = inlined_call_operand.hbm [shape: f32[2,8,128,256], index: 0, kind: input, shape index: {}]
  %s1 = inlined_call_operand.vmem [shape: bf16[128,288], index: 1, kind: input, shape index: {}]
  %s2 = inlined_call_operand.hbm [shape: f32[9,256], index: 2, kind: input, shape index: {}]
  %s3 = inlined_call_operand.hbm [shape: f32[2,8,32,256], index: 3, kind: output, shape index: {0}]
  %s4 = inlined_call_operand.hbm [shape: f32[2,32,256], index: 4, kind: output, shape index: {1}]
  %s5 = inlined_call_operand.hbm [shape: f32[2,32,256], index: 5, kind: output, shape index: {2}]
  %6 = xla_tuple %s3, %s4, %s5
  %s7 = sld [smem:[#allocation0]]
  $region77: #{tpu_custom_call.1} parent=0
    _
  %s9 = ssub.s32 1, %s7
  %s10 = scalar_select 0, %s9, %s7
  $region1: #{tpu_custom_call.1} parent=0
    #allocation4 [shape = 'u8[262144]{0}', space=vmem, size = 0x40000, scoped, tag = 'input window, operand 0']
    #allocation5 [shape = 's32[2]{0}', space=sflag, size = 0x8, scoped, tag = 'scoped memory for tpu_custom_call.1']
    #allocation6 [shape = 's32[2]{0}', space=sflag, size = 0x8, scoped, tag = 'scoped memory for tpu_custom_call.1']
    #allocation7 [shape = 'u8[16384]{0}', space=vmem, size = 0x4000, scoped, tag = 'input window, operand 2, single buffered']
    #allocation8 [shape = 's32[1]{0}', space=sflag, size = 0x4, scoped, tag = 'scoped memory for tpu_custom_call.1']
    #allocation9 [shape = 'u8[65536]{0}', space=vmem, size = 0x10000, scoped, tag = 'output window, operand 0']
    #allocation10 [shape = 'u8[65536]{0}', space=vmem, size = 0x10000, scoped, tag = 'output window, operand 1']
    #allocation11 [shape = 's32[2]{0}', space=sflag, size = 0x8, scoped, tag = 'scoped memory for tpu_custom_call.1']
    #allocation12 [shape = 'u8[65536]{0}', space=vmem, size = 0x10000, scoped, tag = 'output window, operand 2']
    %11 = vsyncpa [#allocation5], 0
    %s12 = scalar_lea.sflag [#allocation5], 1
    %13 = vsyncpa %s12, 0
    %14 = vsyncpa [#allocation8], 0
    %15 = vsyncpa [#allocation6], 0
    %s16 = scalar_lea.sflag [#allocation6], 1
    %17 = vsyncpa %s16, 0
    %18 = vsyncpa [#allocation11], 0
    %s19 = scalar_lea.sflag [#allocation11], 1
    %20 = vsyncpa %s19, 0
    loop: start=0, step=1, limit=18
    $region2: #{tpu_custom_call.1} parent=1 // loop_pre_header
      _
    $region3: #{tpu_custom_call.1} parent=1 // loop_header
      %s22 = sphi 0, %s26
      %p23 = scmp.ge.s32.totalorder %s22, 18
      %s29 = sphi 0, %s41
      %s30 = sphi 0, %s37
      %s31 = sphi 0, %s29
      %s32 = sphi 0, %s30
      %s33 = sphi 0, %s31
      %s34 = sphi 0, %s32
      %s46 = sphi 0, %s48
      %s49 = sphi 0, %s46
      %s50 = sphi 0, %s49
      %s66 = sphi 0, %s50
      %s70 = sphi 0, %s70
      %s72 = sphi 0, %s70
      %s73 = sphi 0, %s72
      %s87 = sphi 0, %s73
      %s91 = sphi 0, %s91
      %s93 = sphi 0, %s91
      %s94 = sphi 0, %s93
      %s108 = sphi 0, %s94
      %s116 = sphi 0, %s118
      %s119 = sphi 0, %s116
      %s120 = sphi 0, %s119
      %s136 = sphi 0, %s120
      %s142 = sphi 0, %s144
      %s145 = sphi 0, %s142
      %s146 = sphi 0, %s145
      %s162 = sphi 0, %s146
      %s168 = sphi 0, %s170
      %s171 = sphi 0, %s168
      %s172 = sphi 0, %s171
      %s188 = sphi 0, %s172
    $region4: #{tpu_custom_call.1} parent=1 // loop_header_branch
      %25 = sbr.rel (%p23) target = $region8
    $region5: #{tpu_custom_call.1} parent=1 // loop_body
      %s27 = ssub.s32 %s22, 1
      %s28 = ssub.s32 %s22, 2
      %s35 = sadd.s32 1, %s30
      %p36 = scmp.ge.s32.totalorder %s35, 8
      %s37 = scalar_select %p36, 0, %s35
      %s38 = sadd.s32 1, %s29
      %s39 = scalar_select %p36, %s38, %s29
      %p40 = scmp.ge.s32.totalorder %s39, 2
      %s41 = scalar_select %p40, 0, %s39
      %s42 = ssub.s32 %s29, %s41
      %s43 = ssub.s32 %s30, %s37
      %s44 = sor.u32 %s42, %s43
      %p45 = scmp.eq.s32.totalorder %s44, 0
      %s47 = sadd.s32 %s46, 1
      %s48 = scalar_select %p45, %s46, %s47
      %p51 = pneg %p45
      %p52 = scmp.eq.s32.totalorder %s22, 15
      %p53 = por %p51, %p52
      %p54 = scmp.ne.s32.totalorder %s46, %s49
      %p55 = scmp.eq.s32.totalorder %s22, 0
      %p56 = por %p54, %p55
      %p57 = scmp.ne.s32.totalorder %s46, %s49
      %p58 = scmp.eq.s32.totalorder %s27, 15
      %p59 = por %p57, %p58
      %p60 = scmp.ne.s32.totalorder %s49, %s50
      %p61 = scmp.eq.s32.totalorder %s27, 0
      %p62 = por %p60, %p61
      %p63 = scmp.ne.s32.totalorder %s49, %s50
      %p64 = scmp.eq.s32.totalorder %s28, 15
      %p65 = por %p63, %p64
      %p67 = scmp.ne.s32.totalorder %s50, %s66
      %p68 = scmp.eq.s32.totalorder %s28, 0
      %p69 = por %p67, %p68
      %s71 = sadd.s32 %s70, 1
      %p74 = scmp.eq.s32.totalorder %s22, 15
      %p75 = scmp.ne.s32.totalorder %s70, %s72
      %p76 = scmp.eq.s32.totalorder %s22, 0
      %p77 = por %p75, %p76
      %p78 = scmp.ne.s32.totalorder %s70, %s72
      %p79 = scmp.eq.s32.totalorder %s27, 15
      %p80 = por %p78, %p79
      %p81 = scmp.ne.s32.totalorder %s72, %s73
      %p82 = scmp.eq.s32.totalorder %s27, 0
      %p83 = por %p81, %p82
      %p84 = scmp.ne.s32.totalorder %s72, %s73
      %p85 = scmp.eq.s32.totalorder %s28, 15
      %p86 = por %p84, %p85
      %p88 = scmp.ne.s32.totalorder %s73, %s87
      %p89 = scmp.eq.s32.totalorder %s28, 0
      %p90 = por %p88, %p89
      %s92 = sadd.s32 %s91, 1
      %p95 = scmp.eq.s32.totalorder %s22, 15
      %p96 = scmp.ne.s32.totalorder %s91, %s93
      %p97 = scmp.eq.s32.totalorder %s22, 0
      %p98 = por %p96, %p97
      %p99 = scmp.ne.s32.totalorder %s91, %s93
      %p100 = scmp.eq.s32.totalorder %s27, 15
      %p101 = por %p99, %p100
      %p102 = scmp.ne.s32.totalorder %s93, %s94
      %p103 = scmp.eq.s32.totalorder %s27, 0
      %p104 = por %p102, %p103
      %p105 = scmp.ne.s32.totalorder %s93, %s94
      %p106 = scmp.eq.s32.totalorder %s28, 15
      %p107 = por %p105, %p106
      %p109 = scmp.ne.s32.totalorder %s94, %s108
      %p110 = scmp.eq.s32.totalorder %s28, 0
      %p111 = por %p109, %p110
      %s112 = ssub.s32 %s29, %s41
      %s113 = ssub.s32 %s30, %s37
      %s114 = sor.u32 %s112, %s113
      %p115 = scmp.eq.s32.totalorder %s114, 0
      %s117 = sadd.s32 %s116, 1
      %s118 = scalar_select %p115, %s116, %s117
      %p121 = pneg %p115
      %p122 = scmp.eq.s32.totalorder %s22, 15
      %p123 = por %p121, %p122
      %p124 = scmp.ne.s32.totalorder %s116, %s119
      %p125 = scmp.eq.s32.totalorder %s22, 0
      %p126 = por %p124, %p125
      %p127 = scmp.ne.s32.totalorder %s116, %s119
      %p128 = scmp.eq.s32.totalorder %s27, 15
      %p129 = por %p127, %p128
      %p130 = scmp.ne.s32.totalorder %s119, %s120
      %p131 = scmp.eq.s32.totalorder %s27, 0
      %p132 = por %p130, %p131
      %p133 = scmp.ne.s32.totalorder %s119, %s120
      %p134 = scmp.eq.s32.totalorder %s28, 15
      %p135 = por %p133, %p134
      %p137 = scmp.ne.s32.totalorder %s120, %s136
      %p138 = scmp.eq.s32.totalorder %s28, 0
      %p139 = por %p137, %p138
      %s140 = ssub.s32 %s29, %s41
      %p141 = scmp.eq.s32.totalorder %s140, 0
      %s143 = sadd.s32 %s142, 1
      %s144 = scalar_select %p141, %s142, %s143
      %p147 = pneg %p141
      %p148 = scmp.eq.s32.totalorder %s22, 15
      %p149 = por %p147, %p148
      %p150 = scmp.ne.s32.totalorder %s142, %s145
      %p151 = scmp.eq.s32.totalorder %s22, 0
      %p152 = por %p150, %p151
      %p153 = scmp.ne.s32.totalorder %s142, %s145
      %p154 = scmp.eq.s32.totalorder %s27, 15
      %p155 = por %p153, %p154
      %p156 = scmp.ne.s32.totalorder %s145, %s146
      %p157 = scmp.eq.s32.totalorder %s27, 0
      %p158 = por %p156, %p157
      %p159 = scmp.ne.s32.totalorder %s145, %s146
      %p160 = scmp.eq.s32.totalorder %s28, 15
      %p161 = por %p159, %p160
      %p163 = scmp.ne.s32.totalorder %s146, %s162
      %p164 = scmp.eq.s32.totalorder %s28, 0
      %p165 = por %p163, %p164
      %s166 = ssub.s32 %s29, %s41
      %p167 = scmp.eq.s32.totalorder %s166, 0
      %s169 = sadd.s32 %s168, 1
      %s170 = scalar_select %p167, %s168, %s169
      %p173 = pneg %p167
      %p174 = scmp.eq.s32.totalorder %s22, 15
      %p175 = por %p173, %p174
      %p176 = scmp.ne.s32.totalorder %s168, %s171
      %p177 = scmp.eq.s32.totalorder %s22, 0
      %p178 = por %p176, %p177
      %p179 = scmp.ne.s32.totalorder %s168, %s171
      %p180 = scmp.eq.s32.totalorder %s27, 15
      %p181 = por %p179, %p180
      %p182 = scmp.ne.s32.totalorder %s171, %s172
      %p183 = scmp.eq.s32.totalorder %s27, 0
      %p184 = por %p182, %p183
      %p185 = scmp.ne.s32.totalorder %s171, %s172
      %p186 = scmp.eq.s32.totalorder %s28, 15
      %p187 = por %p185, %p186
      %p189 = scmp.ne.s32.totalorder %s172, %s188
      %p190 = scmp.eq.s32.totalorder %s28, 0
      %p191 = por %p189, %p190
      %p192 = scmp.le.s32.totalorder 1, %s22
      %p193 = scmp.lt.s32.totalorder %s22, 17
      %p194 = pnand %p192, %p193
      %p195 = pneg %p194
      // Predicated region
      $region9: #{tpu_custom_call.1} parent=5 // pred_check
        _
      $region10: #{tpu_custom_call.1} parent=5 // pred_check_branch
        %197 = sbr.rel (%p194) target = $region12
      $region11: #{tpu_custom_call.1} parent=5 // pred_region
        %s198 = ssub.s32 %s22, 1
        // Predicated region
        $region13: #{tpu_custom_call.1} parent=11 // pred_check
          %p199 = pneg %p83
        $region14: #{tpu_custom_call.1} parent=11 // pred_check_branch
          %201 = sbr.rel (%p199) target = $region16
        $region15: #{tpu_custom_call.1} parent=11 // pred_region
          _
        $region16: #{tpu_custom_call.1} parent=11 // pred_fallthru
          _
        // Predicated region
        $region17: #{tpu_custom_call.1} parent=11 // pred_check
          %p202 = pneg %p104
        $region18: #{tpu_custom_call.1} parent=11 // pred_check_branch
          %204 = sbr.rel (%p202) target = $region20
        $region19: #{tpu_custom_call.1} parent=11 // pred_region
          %s206 = ssub.s32 512, 512
          %207 = vsyncadd [#allocation8], %s206
          %s208 = sshll.u32 [#allocation7], 4
          %s209 = int_to_ptr.vmem [resolvable:$true] %s208
          %214 = dma.hbm_to_vmem [thread:$0]  %s2, 512, %s209, [#allocation8], 256, 256, 16
        $region20: #{tpu_custom_call.1} parent=11 // pred_fallthru
          _
      $region12: #{tpu_custom_call.1} parent=5 // pred_fallthru
        _
      %p215 = scmp.lt.s32.totalorder %s22, 16
      // Predicated region
      $region21: #{tpu_custom_call.1} parent=5 // pred_check
        %p216 = pneg %p215
      $region22: #{tpu_custom_call.1} parent=5 // pred_check_branch
        %218 = sbr.rel (%p216) target = $region24
      $region23: #{tpu_custom_call.1} parent=5 // pred_region
        // Predicated region
        $region25: #{tpu_custom_call.1} parent=23 // pred_check
          %p219 = pneg %p56
        $region26: #{tpu_custom_call.1} parent=23 // pred_check_branch
          %221 = sbr.rel (%p219) target = $region28
        $region27: #{tpu_custom_call.1} parent=23 // pred_region
          %s222 = sand.u32 %s46, 1
          %s223 = scalar_lea.sflag [#allocation5], %s222
          %s224 = sand.u32 %s46, 1
          %s225 = smul.addr %s224, 256
          %s226 = scalar_lea.vmem [#allocation4], %s225
          %s228 = ssub.s32 4096, 4096
          %229 = vsyncadd %s223, %s228
          %s230 = smul.addr %s30, 32
          %s231 = smul.addr %s29, 256
          %s232 = sadd.s32 %s230, %s231
          %s233 = smul.addr %s232, 128
          %s234 = scalar_lea.hbm %s0, %s233
          %s235 = sshll.u32 %s226, 4
          %s236 = int_to_ptr.vmem [resolvable:$true] %s235
          %241 = dma.hbm_to_vmem [thread:$0]  %s234, 4096, %s236, %s223, 256, 256, 16
        $region28: #{tpu_custom_call.1} parent=23 // pred_fallthru
          _
      $region24: #{tpu_custom_call.1} parent=5 // pred_fallthru
        _
      %p242 = scmp.le.s32.totalorder 1, %s22
      %p243 = scmp.lt.s32.totalorder %s22, 17
      %p244 = pnand %p242, %p243
      %p245 = pneg %p244
      // Predicated region
      $region29: #{tpu_custom_call.1} parent=5 // pred_check
        _
      $region30: #{tpu_custom_call.1} parent=5 // pred_check_branch
        %247 = sbr.rel (%p244) target = $region32
      $region31: #{tpu_custom_call.1} parent=5 // pred_region
        %s248 = ssub.s32 %s22, 1
        %s249 = sand.u32 %s49, 1
        %s250 = scalar_lea.sflag [#allocation5], %s249
        %s251 = sand.u32 %s49, 1
        %s252 = smul.addr %s251, 256
        %s253 = scalar_lea.vmem [#allocation4], %s252
        // Predicated region
        $region33: #{tpu_custom_call.1} parent=31 // pred_check
          %p254 = pneg %p62
        $region34: #{tpu_custom_call.1} parent=31 // pred_check_branch
          %256 = sbr.rel (%p254) target = $region36
        $region35: #{tpu_custom_call.1} parent=31 // pred_region
          %257 = dma.done %s250, 4096
        $region36: #{tpu_custom_call.1} parent=31 // pred_fallthru
          _
        // Predicated region
        $region37: #{tpu_custom_call.1} parent=31 // pred_check
          %p258 = pneg %p104
        $region38: #{tpu_custom_call.1} parent=31 // pred_check_branch
          %260 = sbr.rel (%p258) target = $region40
        $region39: #{tpu_custom_call.1} parent=31 // pred_region
          %261 = dma.done [#allocation8], 512
        $region40: #{tpu_custom_call.1} parent=31 // pred_fallthru
          _
        %s262 = sand.u32 %s49, 1
        %s263 = scalar_lea.sflag [#allocation5], %s262
        %s264 = sand.u32 %s49, 1
        %s265 = smul.addr %s264, 256
        %s266 = scalar_lea.vmem [#allocation4], %s265
        %p267 = pneg %p62
        %p268 = pneg %p59
        %p269 = pneg %p83
        %p270 = pneg %p80
        %p271 = pneg %p104
        %p272 = pneg %p101
        %p273 = pneg %p132
        %p274 = pneg %p129
        %s275 = sand.u32 %s119, 1
        %s276 = scalar_lea.sflag [#allocation6], %s275
        %s277 = sand.u32 %s119, 1
        %s278 = smul.addr %s277, 64
        %s279 = scalar_lea.vmem [#allocation9], %s278
        %p280 = pneg %p158
        %p281 = pneg %p155
        %s282 = sand.u32 %s27, 1
        %s283 = scalar_lea.sflag [#allocation11], %s282
        %s284 = sand.u32 %s145, 1
        %s285 = smul.addr %s284, 64
        %s286 = scalar_lea.vmem [#allocation10], %s285
        %p287 = pneg %p184
        %p288 = pneg %p181
        %s289 = sand.u32 %s27, 1
        %s290 = scalar_lea.sflag [#allocation11], %s289
        %s291 = sand.u32 %s171, 1
        %s292 = smul.addr %s291, 64
        %s293 = scalar_lea.vmem [#allocation12], %s292
        %p295 = scmp.eq.s32.totalorder %s32, 0
        // Predicated region
        $region41: #{tpu_custom_call.1} parent=31 // pred_check
          %p296 = pneg %p295
        $region42: #{tpu_custom_call.1} parent=31 // pred_check_branch
          %298 = sbr.rel (%p296) target = $region44
        $region43: #{tpu_custom_call.1} parent=31 // pred_region
          %299 = vst [vmem:[#allocation2] sm:$0xff] 0.0
          %300 = vst [vmem:[#allocation2 + $0x8] sm:$0xff] 0.0
          %301 = vst [vmem:[#allocation2 + $0x10] sm:$0xff] 0.0
          %302 = vst [vmem:[#allocation2 + $0x18] sm:$0xff] 0.0
          %303 = vst [vmem:[#allocation2 + $0x20] sm:$0xff] 0.0
          %304 = vst [vmem:[#allocation2 + $0x28] sm:$0xff] 0.0
          %305 = vst [vmem:[#allocation2 + $0x30] sm:$0xff] 0.0
          %306 = vst [vmem:[#allocation2 + $0x38] sm:$0xff] 0.0
          %307 = vst [vmem:[#allocation3] sm:$0xff] 0.0
          %308 = vst [vmem:[#allocation3 + $0x8] sm:$0xff] 0.0
          %309 = vst [vmem:[#allocation3 + $0x10] sm:$0xff] 0.0
          %310 = vst [vmem:[#allocation3 + $0x18] sm:$0xff] 0.0
          %311 = vst [vmem:[#allocation3 + $0x20] sm:$0xff] 0.0
          %312 = vst [vmem:[#allocation3 + $0x28] sm:$0xff] 0.0
          %313 = vst [vmem:[#allocation3 + $0x30] sm:$0xff] 0.0
          %314 = vst [vmem:[#allocation3 + $0x38] sm:$0xff] 0.0
        $region44: #{tpu_custom_call.1} parent=31 // pred_fallthru
          _
        %v315 = vld [vmem:[#allocation2] sm:$0xff]
        %v316 = vld [vmem:[#allocation2 + $0x8] sm:$0xff]
        %v317 = vld [vmem:[#allocation2 + $0x10] sm:$0xff]
        %v318 = vld [vmem:[#allocation2 + $0x18] sm:$0xff]
        %v319 = vld [vmem:[#allocation2 + $0x20] sm:$0xff]
        %v320 = vld [vmem:[#allocation2 + $0x28] sm:$0xff]
        %v321 = vld [vmem:[#allocation2 + $0x30] sm:$0xff]
        %v322 = vld [vmem:[#allocation2 + $0x38] sm:$0xff]
        %v323 = vld [vmem:[#allocation7] sm:$0xff]
        %v324 = vld [vmem:[#allocation7 + $0x8] sm:$0xff]
        %v325 = vld [vmem:[#allocation7 + $0x10] sm:$0x1]
        %v326 = vld [vmem:[#allocation7 + $0x18] sm:$0x1]
        %327 = vrot.lane.b32.xlu0 %v315, 17
        %v328 = vpop.permute.xlu0 %327
        %329 = vrot.lane.b32.xlu0 %v317, 17
        %v330 = vpop.permute.xlu0 %329
        %331 = vrot.lane.b32.xlu0 %v319, 17
        %v332 = vpop.permute.xlu0 %331
        %333 = vrot.lane.b32.xlu0 %v321, 17
        %v334 = vpop.permute.xlu0 %333
        %335 = vrot.lane.b32.xlu0 %v316, 17
        %v336 = vpop.permute.xlu0 %335
        %337 = vrot.lane.b32.xlu0 %v318, 17
        %v338 = vpop.permute.xlu0 %337
        %339 = vrot.lane.b32.xlu0 %v320, 17
        %v340 = vpop.permute.xlu0 %339
        %341 = vrot.lane.b32.xlu0 %v322, 17
        %v342 = vpop.permute.xlu0 %341
        %v343 = vlaneseq
        %v344 = vand.u32 %v343, 127
        %vm345 = vcmp.lt.s32.totalorder %v344, 17
        %v346 = vsel %vm345, %v328, %v336
        %v347 = vsel %vm345, %v330, %v338
        %v348 = vsel %vm345, %v332, %v340
        %v349 = vsel %vm345, %v334, %v342
        %v350 = vsel %vm345, %v336, %v328
        %v351 = vsel %vm345, %v338, %v330
        %v352 = vsel %vm345, %v340, %v332
        %v353 = vsel %vm345, %v342, %v334
        %v354 = vlaneseq
        %v355 = vshrl.u32 %v354, 7
        %v356 = vsub.s32 0, %v355
        %v357 = vrot.slane %v323, %v356
        %v358 = vlaneseq
        %v359 = vshrl.u32 %v358, 7
        %v360 = vsub.s32 0, %v359
        %v361 = vrot.slane %v324, %v360
        %v362 = vmul.f32 %v350, %v357
        %v363 = vmul.f32 %v346, %v361
        %v364 = vmul.f32 %v351, %v357
        %v365 = vmul.f32 %v347, %v361
        %v366 = vmul.f32 %v352, %v357
        %v367 = vmul.f32 %v348, %v361
        %v368 = vmul.f32 %v353, %v357
        %v369 = vmul.f32 %v349, %v361
        %370 = vrot.lane.b32.xlu0 %v315, 16
        %v371 = vpop.permute.xlu0 %370
        %372 = vrot.lane.b32.xlu0 %v317, 16
        %v373 = vpop.permute.xlu0 %372
        %374 = vrot.lane.b32.xlu0 %v319, 16
        %v375 = vpop.permute.xlu0 %374
        %376 = vrot.lane.b32.xlu0 %v321, 16
        %v377 = vpop.permute.xlu0 %376
        %378 = vrot.lane.b32.xlu0 %v316, 16
        %v379 = vpop.permute.xlu0 %378
        %380 = vrot.lane.b32.xlu0 %v318, 16
        %v381 = vpop.permute.xlu0 %380
        %382 = vrot.lane.b32.xlu0 %v320, 16
        %v383 = vpop.permute.xlu0 %382
        %384 = vrot.lane.b32.xlu0 %v322, 16
        %v385 = vpop.permute.xlu0 %384
        %vm386 = vcmp.lt.s32.totalorder %v344, 16
        %v387 = vsel %vm386, %v371, %v379
        %v388 = vsel %vm386, %v373, %v381
        %v389 = vsel %vm386, %v375, %v383
        %v390 = vsel %vm386, %v377, %v385
        %v391 = vsel %vm386, %v379, %v371
        %v392 = vsel %vm386, %v381, %v373
        %v393 = vsel %vm386, %v383, %v375
        %v394 = vsel %vm386, %v385, %v377
        %v395 = vlaneseq
        %v396 = vshrl.u32 %v395, 7
        %v397 = vsub.s32 1, %v396
        %v398 = vrot.slane %v323, %v397
        %v399 = vlaneseq
        %v400 = vshrl.u32 %v399, 7
        %v401 = vsub.s32 1, %v400
        %v402 = vrot.slane %v324, %v401
        %v403 = vmul.f32 %v391, %v398
        %v404 = vmul.f32 %v387, %v402
        %v405 = vmul.f32 %v392, %v398
        %v406 = vmul.f32 %v388, %v402
        %v407 = vmul.f32 %v393, %v398
        %v408 = vmul.f32 %v389, %v402
        %v409 = vmul.f32 %v394, %v398
        %v410 = vmul.f32 %v390, %v402
        %411 = vrot.lane.b32.xlu0 %v315, 15
        %v412 = vpop.permute.xlu0 %411
        %413 = vrot.lane.b32.xlu0 %v317, 15
        %v414 = vpop.permute.xlu0 %413
        %415 = vrot.lane.b32.xlu0 %v319, 15
        %v416 = vpop.permute.xlu0 %415
        %417 = vrot.lane.b32.xlu0 %v321, 15
        %v418 = vpop.permute.xlu0 %417
        %419 = vrot.lane.b32.xlu0 %v316, 15
        %v420 = vpop.permute.xlu0 %419
        %421 = vrot.lane.b32.xlu0 %v318, 15
        %v422 = vpop.permute.xlu0 %421
        %423 = vrot.lane.b32.xlu0 %v320, 15
        %v424 = vpop.permute.xlu0 %423
        %425 = vrot.lane.b32.xlu0 %v322, 15
        %v426 = vpop.permute.xlu0 %425
        %vm427 = vcmp.lt.s32.totalorder %v344, 15
        %v428 = vsel %vm427, %v412, %v420
        %v429 = vsel %vm427, %v414, %v422
        %v430 = vsel %vm427, %v416, %v424
        %v431 = vsel %vm427, %v418, %v426
        %v432 = vsel %vm427, %v420, %v412
        %v433 = vsel %vm427, %v422, %v414
        %v434 = vsel %vm427, %v424, %v416
        %v435 = vsel %vm427, %v426, %v418
        %v436 = vlaneseq
        %v437 = vshrl.u32 %v436, 7
        %v438 = vsub.s32 2, %v437
        %v439 = vrot.slane %v323, %v438
        %v440 = vlaneseq
        %v441 = vshrl.u32 %v440, 7
        %v442 = vsub.s32 2, %v441
        %v443 = vrot.slane %v324, %v442
        %v444 = vmul.f32 %v432, %v439
        %v445 = vmul.f32 %v428, %v443
        %v446 = vmul.f32 %v433, %v439
        %v447 = vmul.f32 %v429, %v443
        %v448 = vmul.f32 %v434, %v439
        %v449 = vmul.f32 %v430, %v443
        %v450 = vmul.f32 %v435, %v439
        %v451 = vmul.f32 %v431, %v443
        %452 = vrot.lane.b32.xlu0 %v315, 1
        %v453 = vpop.permute.xlu0 %452
        %454 = vrot.lane.b32.xlu0 %v317, 1
        %v455 = vpop.permute.xlu0 %454
        %456 = vrot.lane.b32.xlu0 %v319, 1
        %v457 = vpop.permute.xlu0 %456
        %458 = vrot.lane.b32.xlu0 %v321, 1
        %v459 = vpop.permute.xlu0 %458
        %460 = vrot.lane.b32.xlu0 %v316, 1
        %v461 = vpop.permute.xlu0 %460
        %462 = vrot.lane.b32.xlu0 %v318, 1
        %v463 = vpop.permute.xlu0 %462
        %464 = vrot.lane.b32.xlu0 %v320, 1
        %v465 = vpop.permute.xlu0 %464
        %466 = vrot.lane.b32.xlu0 %v322, 1
        %v467 = vpop.permute.xlu0 %466
        %vm468 = vcmp.lt.s32.totalorder %v344, 1
        %v469 = vsel %vm468, %v453, %v461
        %v470 = vsel %vm468, %v455, %v463
        %v471 = vsel %vm468, %v457, %v465
        %v472 = vsel %vm468, %v459, %v467
        %v473 = vsel %vm468, %v461, %v453
        %v474 = vsel %vm468, %v463, %v455
        %v475 = vsel %vm468, %v465, %v457
        %v476 = vsel %vm468, %v467, %v459
        %v477 = vlaneseq
        %v478 = vshrl.u32 %v477, 7
        %v479 = vsub.s32 3, %v478
        %v480 = vrot.slane %v323, %v479
        %v481 = vlaneseq
        %v482 = vshrl.u32 %v481, 7
        %v483 = vsub.s32 3, %v482
        %v484 = vrot.slane %v324, %v483
        %v485 = vmul.f32 %v473, %v480
        %v486 = vmul.f32 %v469, %v484
        %v487 = vmul.f32 %v474, %v480
        %v488 = vmul.f32 %v470, %v484
        %v489 = vmul.f32 %v475, %v480
        %v490 = vmul.f32 %v471, %v484
        %v491 = vmul.f32 %v476, %v480
        %v492 = vmul.f32 %v472, %v484
        %493 = vrot.lane.b32.xlu0 %v315, 127
        %v494 = vpop.permute.xlu0 %493
        %495 = vrot.lane.b32.xlu0 %v317, 127
        %v496 = vpop.permute.xlu0 %495
        %497 = vrot.lane.b32.xlu0 %v319, 127
        %v498 = vpop.permute.xlu0 %497
        %499 = vrot.lane.b32.xlu0 %v321, 127
        %v500 = vpop.permute.xlu0 %499
        %501 = vrot.lane.b32.xlu0 %v316, 127
        %v502 = vpop.permute.xlu0 %501
        %503 = vrot.lane.b32.xlu0 %v318, 127
        %v504 = vpop.permute.xlu0 %503
        %505 = vrot.lane.b32.xlu0 %v320, 127
        %v506 = vpop.permute.xlu0 %505
        %507 = vrot.lane.b32.xlu0 %v322, 127
        %v508 = vpop.permute.xlu0 %507
        %vm509 = vcmp.lt.s32.totalorder %v344, 127
        %v510 = vsel %vm509, %v494, %v502
        %v511 = vsel %vm509, %v496, %v504
        %v512 = vsel %vm509, %v498, %v506
        %v513 = vsel %vm509, %v500, %v508
        %v514 = vsel %vm509, %v502, %v494
        %v515 = vsel %vm509, %v504, %v496
        %v516 = vsel %vm509, %v506, %v498
        %v517 = vsel %vm509, %v508, %v500
        %v518 = vlaneseq
        %v519 = vshrl.u32 %v518, 7
        %v520 = vsub.s32 5, %v519
        %v521 = vrot.slane %v323, %v520
        %v522 = vlaneseq
        %v523 = vshrl.u32 %v522, 7
        %v524 = vsub.s32 5, %v523
        %v525 = vrot.slane %v324, %v524
        %v526 = vmul.f32 %v510, %v521
        %v527 = vmul.f32 %v514, %v525
        %v528 = vmul.f32 %v511, %v521
        %v529 = vmul.f32 %v515, %v525
        %v530 = vmul.f32 %v512, %v521
        %v531 = vmul.f32 %v516, %v525
        %v532 = vmul.f32 %v513, %v521
        %v533 = vmul.f32 %v517, %v525
        %534 = vrot.lane.b32.xlu0 %v315, 113
        %v535 = vpop.permute.xlu0 %534
        %536 = vrot.lane.b32.xlu0 %v317, 113
        %v537 = vpop.permute.xlu0 %536
        %538 = vrot.lane.b32.xlu0 %v319, 113
        %v539 = vpop.permute.xlu0 %538
        %540 = vrot.lane.b32.xlu0 %v321, 113
        %v541 = vpop.permute.xlu0 %540
        %542 = vrot.lane.b32.xlu0 %v316, 113
        %v543 = vpop.permute.xlu0 %542
        %544 = vrot.lane.b32.xlu0 %v318, 113
        %v545 = vpop.permute.xlu0 %544
        %546 = vrot.lane.b32.xlu0 %v320, 113
        %v547 = vpop.permute.xlu0 %546
        %548 = vrot.lane.b32.xlu0 %v322, 113
        %v549 = vpop.permute.xlu0 %548
        %vm550 = vcmp.lt.s32.totalorder %v344, 113
        %v551 = vsel %vm550, %v535, %v543
        %v552 = vsel %vm550, %v537, %v545
        %v553 = vsel %vm550, %v539, %v547
        %v554 = vsel %vm550, %v541, %v549
        %v555 = vsel %vm550, %v543, %v535
        %v556 = vsel %vm550, %v545, %v537
        %v557 = vsel %vm550, %v547, %v539
        %v558 = vsel %vm550, %v549, %v541
        %v559 = vlaneseq
        %v560 = vshrl.u32 %v559, 7
        %v561 = vsub.s32 6, %v560
        %v562 = vrot.slane %v323, %v561
        %v563 = vlaneseq
        %v564 = vshrl.u32 %v563, 7
        %v565 = vsub.s32 6, %v564
        %v566 = vrot.slane %v324, %v565
        %v567 = vmul.f32 %v551, %v562
        %v568 = vmul.f32 %v555, %v566
        %v569 = vmul.f32 %v552, %v562
        %v570 = vmul.f32 %v556, %v566
        %v571 = vmul.f32 %v553, %v562
        %v572 = vmul.f32 %v557, %v566
        %v573 = vmul.f32 %v554, %v562
        %v574 = vmul.f32 %v558, %v566
        %575 = vrot.lane.b32.xlu0 %v315, 112
        %v576 = vpop.permute.xlu0 %575
        %577 = vrot.lane.b32.xlu0 %v317, 112
        %v578 = vpop.permute.xlu0 %577
        %579 = vrot.lane.b32.xlu0 %v319, 112
        %v580 = vpop.permute.xlu0 %579
        %581 = vrot.lane.b32.xlu0 %v321, 112
        %v582 = vpop.permute.xlu0 %581
        %583 = vrot.lane.b32.xlu0 %v316, 112
        %v584 = vpop.permute.xlu0 %583
        %585 = vrot.lane.b32.xlu0 %v318, 112
        %v586 = vpop.permute.xlu0 %585
        %587 = vrot.lane.b32.xlu0 %v320, 112
        %v588 = vpop.permute.xlu0 %587
        %589 = vrot.lane.b32.xlu0 %v322, 112
        %v590 = vpop.permute.xlu0 %589
        %vm591 = vcmp.lt.s32.totalorder %v344, 112
        %v592 = vsel %vm591, %v576, %v584
        %v593 = vsel %vm591, %v578, %v586
        %v594 = vsel %vm591, %v580, %v588
        %v595 = vsel %vm591, %v582, %v590
        %v596 = vsel %vm591, %v584, %v576
        %v597 = vsel %vm591, %v586, %v578
        %v598 = vsel %vm591, %v588, %v580
        %v599 = vsel %vm591, %v590, %v582
        %v600 = vlaneseq
        %v601 = vshrl.u32 %v600, 7
        %v602 = vsub.s32 7, %v601
        %v603 = vrot.slane %v323, %v602
        %v604 = vlaneseq
        %v605 = vshrl.u32 %v604, 7
        %v606 = vsub.s32 7, %v605
        %v607 = vrot.slane %v324, %v606
        %v608 = vmul.f32 %v592, %v603
        %v609 = vmul.f32 %v596, %v607
        %v610 = vmul.f32 %v593, %v603
        %v611 = vmul.f32 %v597, %v607
        %v612 = vmul.f32 %v594, %v603
        %v613 = vmul.f32 %v598, %v607
        %v614 = vmul.f32 %v595, %v603
        %v615 = vmul.f32 %v599, %v607
        %616 = vrot.lane.b32.xlu0 %v315, 111
        %v617 = vpop.permute.xlu0 %616
        %618 = vrot.lane.b32.xlu0 %v317, 111
        %v619 = vpop.permute.xlu0 %618
        %620 = vrot.lane.b32.xlu0 %v319, 111
        %v621 = vpop.permute.xlu0 %620
        %622 = vrot.lane.b32.xlu0 %v321, 111
        %v623 = vpop.permute.xlu0 %622
        %624 = vrot.lane.b32.xlu0 %v316, 111
        %v625 = vpop.permute.xlu0 %624
        %626 = vrot.lane.b32.xlu0 %v318, 111
        %v627 = vpop.permute.xlu0 %626
        %628 = vrot.lane.b32.xlu0 %v320, 111
        %v629 = vpop.permute.xlu0 %628
        %630 = vrot.lane.b32.xlu0 %v322, 111
        %v631 = vpop.permute.xlu0 %630
        %vm632 = vcmp.lt.s32.totalorder %v344, 111
        %v633 = vsel %vm632, %v617, %v625
        %v634 = vsel %vm632, %v619, %v627
        %v635 = vsel %vm632, %v621, %v629
        %v636 = vsel %vm632, %v623, %v631
        %v637 = vsel %vm632, %v625, %v617
        %v638 = vsel %vm632, %v627, %v619
        %v639 = vsel %vm632, %v629, %v621
        %v640 = vsel %vm632, %v631, %v623
        %v641 = vlaneseq
        %v642 = vshrl.u32 %v641, 7
        %v643 = vsub.s32 0, %v642
        %v644 = vrot.slane %v325, %v643
        %v645 = vlaneseq
        %v646 = vshrl.u32 %v645, 7
        %v647 = vsub.s32 0, %v646
        %v648 = vrot.slane %v326, %v647
        %v649 = vmul.f32 %v633, %v644
        %v650 = vmul.f32 %v637, %v648
        %v651 = vmul.f32 %v634, %v644
        %v652 = vmul.f32 %v638, %v648
        %v653 = vmul.f32 %v635, %v644
        %v654 = vmul.f32 %v639, %v648
        %v655 = vmul.f32 %v636, %v644
        %v656 = vmul.f32 %v640, %v648
        %v657 = vpack.c.bf16 %v364, %v362
        %v658 = vpack.c.bf16 %v365, %v363
        %v659 = vpack.c.bf16 %v368, %v366
        %v660 = vpack.c.bf16 %v369, %v367
        %v661 = vpack.c.bf16 %v405, %v403
        %v662 = vpack.c.bf16 %v406, %v404
        %v663 = vpack.c.bf16 %v409, %v407
        %v664 = vpack.c.bf16 %v410, %v408
        %v665 = vpack.c.bf16 %v446, %v444
        %v666 = vpack.c.bf16 %v447, %v445
        %v667 = vpack.c.bf16 %v450, %v448
        %v668 = vpack.c.bf16 %v451, %v449
        %v669 = vpack.c.bf16 %v487, %v485
        %v670 = vpack.c.bf16 %v488, %v486
        %v671 = vpack.c.bf16 %v491, %v489
        %v672 = vpack.c.bf16 %v492, %v490
        %v673 = vpack.c.bf16 %v317, %v315
        %v674 = vpack.c.bf16 %v318, %v316
        %v675 = vpack.c.bf16 %v321, %v319
        %v676 = vpack.c.bf16 %v322, %v320
        %v677 = vpack.c.bf16 %v528, %v526
        %v678 = vpack.c.bf16 %v529, %v527
        %v679 = vpack.c.bf16 %v532, %v530
        %v680 = vpack.c.bf16 %v533, %v531
        %v681 = vpack.c.bf16 %v569, %v567
        %v682 = vpack.c.bf16 %v570, %v568
        %v683 = vpack.c.bf16 %v573, %v571
        %v684 = vpack.c.bf16 %v574, %v572
        %v685 = vpack.c.bf16 %v610, %v608
        %v686 = vpack.c.bf16 %v611, %v609
        %v687 = vpack.c.bf16 %v614, %v612
        %v688 = vpack.c.bf16 %v615, %v613
        %v689 = vpack.c.bf16 %v651, %v649
        %v690 = vpack.c.bf16 %v652, %v650
        %v691 = vpack.c.bf16 %v655, %v653
        %v692 = vpack.c.bf16 %v656, %v654
        %v693 = vld [vmem:[%s1] sm:$0xff]
        %v694 = vld [vmem:[%s1 + $0x8] sm:$0xf]
        %v695 = vld [vmem:[%s1 + $0xc] sm:$0xff]
        %v696 = vld [vmem:[%s1 + $0x14] sm:$0xf]
        %v697 = vld [vmem:[%s1 + $0x18] sm:$0xff]
        %v698 = vld [vmem:[%s1 + $0x20] sm:$0xf]
        %v699 = vld [vmem:[%s1 + $0x24] sm:$0xff]
        %v700 = vld [vmem:[%s1 + $0x2c] sm:$0xf]
        %v701 = vld [vmem:[%s1 + $0x30] sm:$0xff]
        %v702 = vld [vmem:[%s1 + $0x38] sm:$0xf]
        %v703 = vld [vmem:[%s1 + $0x3c] sm:$0xff]
        %v704 = vld [vmem:[%s1 + $0x44] sm:$0xf]
        %v705 = vld [vmem:[%s1 + $0x48] sm:$0xff]
        %v706 = vld [vmem:[%s1 + $0x50] sm:$0xf]
        %v707 = vld [vmem:[%s1 + $0x54] sm:$0xff]
        %v708 = vld [vmem:[%s1 + $0x5c] sm:$0xf]
        %v709 = vld [vmem:[%s1 + $0x60] sm:$0xff]
        %v710 = vld [vmem:[%s1 + $0x68] sm:$0xf]
        %v711 = vld [vmem:[%s1 + $0x6c] sm:$0xff]
        %v712 = vld [vmem:[%s1 + $0x74] sm:$0xf]
        %v713 = vld [vmem:[%s1 + $0x78] sm:$0xff]
        %v714 = vld [vmem:[%s1 + $0x80] sm:$0xf]
        %v715 = vld [vmem:[%s1 + $0x84] sm:$0xff]
        %v716 = vld [vmem:[%s1 + $0x8c] sm:$0xf]
        %v717 = vld [vmem:[%s1 + $0x90] sm:$0xff]
        %v718 = vld [vmem:[%s1 + $0x98] sm:$0xf]
        %v719 = vld [vmem:[%s1 + $0x9c] sm:$0xff]
        %v720 = vld [vmem:[%s1 + $0xa4] sm:$0xf]
        %v721 = vld [vmem:[%s1 + $0xa8] sm:$0xff]
        %v722 = vld [vmem:[%s1 + $0xb0] sm:$0xf]
        %v723 = vld [vmem:[%s1 + $0xb4] sm:$0xff]
        %v724 = vld [vmem:[%s1 + $0xbc] sm:$0xf]
        %v725 = vld [vmem:[%s253] sm:$0xff]
        %v726 = vld [vmem:[%s253 + $0x8] sm:$0xff]
        %v727 = vld [vmem:[%s253 + $0x10] sm:$0xff]
        %v728 = vld [vmem:[%s253 + $0x18] sm:$0xff]
        %v729 = vld [vmem:[%s253 + $0x20] sm:$0xff]
        %v730 = vld [vmem:[%s253 + $0x28] sm:$0xff]
        %v731 = vld [vmem:[%s253 + $0x30] sm:$0xff]
        %v732 = vld [vmem:[%s253 + $0x38] sm:$0xff]
        %v733 = vld [vmem:[%s253 + $0x40] sm:$0xff]
        %v734 = vld [vmem:[%s253 + $0x48] sm:$0xff]
        %v735 = vld [vmem:[%s253 + $0x50] sm:$0xff]
        %v736 = vld [vmem:[%s253 + $0x58] sm:$0xff]
        %v737 = vld [vmem:[%s253 + $0x60] sm:$0xff]
        %v738 = vld [vmem:[%s253 + $0x68] sm:$0xff]
        %v739 = vld [vmem:[%s253 + $0x70] sm:$0xff]
        %v740 = vld [vmem:[%s253 + $0x78] sm:$0xff]
        %v741 = vld [vmem:[%s253 + $0x80] sm:$0xff]
        %v742 = vld [vmem:[%s253 + $0x88] sm:$0xff]
        %v743 = vld [vmem:[%s253 + $0x90] sm:$0xff]
        %v744 = vld [vmem:[%s253 + $0x98] sm:$0xff]
        %v745 = vld [vmem:[%s253 + $0xa0] sm:$0xff]
        %v746 = vld [vmem:[%s253 + $0xa8] sm:$0xff]
        %v747 = vld [vmem:[%s253 + $0xb0] sm:$0xff]
        %v748 = vld [vmem:[%s253 + $0xb8] sm:$0xff]
        %v749 = vld [vmem:[%s253 + $0xc0] sm:$0xff]
        %v750 = vld [vmem:[%s253 + $0xc8] sm:$0xff]
        %v751 = vld [vmem:[%s253 + $0xd0] sm:$0xff]
        %v752 = vld [vmem:[%s253 + $0xd8] sm:$0xff]
        %v753 = vld [vmem:[%s253 + $0xe0] sm:$0xff]
        %v754 = vld [vmem:[%s253 + $0xe8] sm:$0xff]
        %v755 = vld [vmem:[%s253 + $0xf0] sm:$0xff]
        %v756 = vld [vmem:[%s253 + $0xf8] sm:$0xff]
        %v789 = vunpack.c.l.b16 %v693
        %v790 = vunpack.c.h.b16 %v693
        %v791 = vunpack.c.l.b16 %v694
        %v792 = vunpack.c.l.b16 %v695
        %v793 = vunpack.c.h.b16 %v695
        %v794 = vunpack.c.l.b16 %v696
        %v795 = vunpack.c.l.b16 %v697
        %v796 = vunpack.c.h.b16 %v697
        %v797 = vunpack.c.l.b16 %v698
        %v798 = vunpack.c.l.b16 %v699
        %v799 = vunpack.c.h.b16 %v699
        %v800 = vunpack.c.l.b16 %v700
        %v801 = vunpack.c.l.b16 %v701
        %v802 = vunpack.c.h.b16 %v701
        %v803 = vunpack.c.l.b16 %v702
        %v804 = vunpack.c.l.b16 %v703
        %v805 = vunpack.c.h.b16 %v703
        %v806 = vunpack.c.l.b16 %v704
        %v807 = vunpack.c.l.b16 %v705
        %v808 = vunpack.c.h.b16 %v705
        %v809 = vunpack.c.l.b16 %v706
        %v810 = vunpack.c.l.b16 %v707
        %v811 = vunpack.c.h.b16 %v707
        %v812 = vunpack.c.l.b16 %v708
        %v813 = vunpack.c.l.b16 %v709
        %v814 = vunpack.c.h.b16 %v709
        %v815 = vunpack.c.l.b16 %v710
        %v816 = vunpack.c.l.b16 %v711
        %v817 = vunpack.c.h.b16 %v711
        %v818 = vunpack.c.l.b16 %v712
        %v819 = vunpack.c.l.b16 %v713
        %v820 = vunpack.c.h.b16 %v713
        %v821 = vunpack.c.l.b16 %v714
        %v822 = vunpack.c.l.b16 %v715
        %v823 = vunpack.c.h.b16 %v715
        %v824 = vunpack.c.l.b16 %v716
        %v825 = vunpack.c.l.b16 %v717
        %v826 = vunpack.c.h.b16 %v717
        %v827 = vunpack.c.l.b16 %v718
        %v828 = vunpack.c.l.b16 %v719
        %v829 = vunpack.c.h.b16 %v719
        %v830 = vunpack.c.l.b16 %v720
        %v831 = vunpack.c.l.b16 %v721
        %v832 = vunpack.c.h.b16 %v721
        %v833 = vunpack.c.l.b16 %v722
        %v834 = vunpack.c.l.b16 %v723
        %v835 = vunpack.c.h.b16 %v723
        %v836 = vunpack.c.l.b16 %v724
        %v837 = vpack.c.b16 %v792, %v789
        %v838 = vpack.c.b16 %v793, %v790
        %v839 = vpack.c.b16 %v794, %v791
        %v840 = vpack.c.b16 %v798, %v795
        %v841 = vpack.c.b16 %v799, %v796
        %v842 = vpack.c.b16 %v800, %v797
        %v843 = vpack.c.b16 %v804, %v801
        %v844 = vpack.c.b16 %v805, %v802
        %v845 = vpack.c.b16 %v806, %v803
        %v846 = vpack.c.b16 %v810, %v807
        %v847 = vpack.c.b16 %v811, %v808
        %v848 = vpack.c.b16 %v812, %v809
        %v849 = vpack.c.b16 %v816, %v813
        %v850 = vpack.c.b16 %v817, %v814
        %v851 = vpack.c.b16 %v818, %v815
        %v852 = vpack.c.b16 %v822, %v819
        %v853 = vpack.c.b16 %v823, %v820
        %v854 = vpack.c.b16 %v824, %v821
        %v855 = vpack.c.b16 %v828, %v825
        %v856 = vpack.c.b16 %v829, %v826
        %v857 = vpack.c.b16 %v830, %v827
        %v858 = vpack.c.b16 %v834, %v831
        %v859 = vpack.c.b16 %v835, %v832
        %v860 = vpack.c.b16 %v836, %v833
        %vm877 = vcmask 261120
        %v879 = vsel %vm877, %v839, 0
        %v882 = vsel %vm877, %v842, 0
        %v885 = vsel %vm877, %v845, 0
        %v888 = vsel %vm877, %v848, 0
        %v891 = vsel %vm877, %v851, 0
        %v894 = vsel %vm877, %v854, 0
        %v897 = vsel %vm877, %v857, 0
        %v900 = vsel %vm877, %v860, 0
        %902 = vmatprep.subr.bf16.mxu0 %v658
        %903 = vmatpush1.bf16.msra.mxu0 %v657
        %904 = vmatprep.subr.bf16.mxu0 %v660
        %905 = vmatpush1.bf16.msra.mxu0 %v659
        %906 = vmatprep.subr.bf16.mxu0 %v662
        %907 = vmatpush1.bf16.msra.mxu0 %v661
        %908 = vmatprep.subr.bf16.mxu0 %v664
        %909 = vmatpush1.bf16.msra.mxu0 %v663
        %910 = vmatprep.subr.bf16.mxu0 %v666
        %911 = vmatpush1.bf16.msra.mxu0 %v665
        %912 = vmatprep.subr.bf16.mxu0 %v668
        %913 = vmatpush1.bf16.msra.mxu0 %v667
        %914 = vmatprep.subr.bf16.mxu0 %v670
        %915 = vmatpush1.bf16.msra.mxu0 %v669
        %916 = vmatprep.subr.bf16.mxu0 %v672
        %917 = vmatpush1.bf16.msra.mxu0 %v671
        %918 = vmatprep.subr.bf16.mxu0 %v674
        %919 = vmatpush1.bf16.msra.mxu0 %v673
        %920 = vmatprep.subr.bf16.mxu0 %v676
        %921 = vmatpush1.bf16.msra.mxu0 %v675
        %922 = vmatprep.subr.bf16.mxu0 %v678
        %923 = vmatpush1.bf16.msra.mxu0 %v677
        %924 = vmatprep.subr.bf16.mxu0 %v680
        %925 = vmatpush1.bf16.msra.mxu0 %v679
        %926 = vmatprep.subr.bf16.mxu0 %v682
        %927 = vmatpush1.bf16.msra.mxu0 %v681
        %928 = vmatprep.subr.bf16.mxu0 %v684
        %929 = vmatpush1.bf16.msra.mxu0 %v683
        %930 = vmatprep.subr.bf16.mxu0 %v686
        %931 = vmatpush1.bf16.msra.mxu0 %v685
        %932 = vmatprep.subr.bf16.mxu0 %v688
        %933 = vmatpush1.bf16.msra.mxu0 %v687
        %934 = vmatprep.mubr.bf16.mxu0 %v838
        %935 = vmatmul.mubr.bf16.gmra.mrb[0].mxu0 %v837
        %v936 = vpop.f32.mrb[0].mxu0
        %v937 = vadd.f32 %v725, %v936
        %v938 = vpop.f32.mrb[0].mxu0
        %v939 = vadd.f32 %v726, %v938
        %v940 = vpop.f32.mrb[0].mxu0
        %v941 = vadd.f32 %v727, %v940
        %v942 = vpop.f32.mrb[0].mxu0
        %v943 = vadd.f32 %v728, %v942
        %944 = vmatprep.mubr.bf16.mxu0 %v841
        %945 = vmatmul.mubr.bf16.gmra.mrb[0].mxu0 %v840
        %v946 = vpop.f32.mrb[0].mxu0
        %v947 = vadd.f32 %v729, %v946
        %v948 = vpop.f32.mrb[0].mxu0
        %v949 = vadd.f32 %v730, %v948
        %v950 = vpop.f32.mrb[0].mxu0
        %v951 = vadd.f32 %v731, %v950
        %v952 = vpop.f32.mrb[0].mxu0
        %v953 = vadd.f32 %v732, %v952
        %954 = vmatprep.mubr.bf16.mxu0 %v844
        %955 = vmatmul.mubr.bf16.gmra.mrb[0].mxu0 %v843
        %v956 = vpop.f32.mrb[0].mxu0
        %v957 = vadd.f32 %v733, %v956
        %v958 = vpop.f32.mrb[0].mxu0
        %v959 = vadd.f32 %v734, %v958
        %v960 = vpop.f32.mrb[0].mxu0
        %v961 = vadd.f32 %v735, %v960
        %v962 = vpop.f32.mrb[0].mxu0
        %v963 = vadd.f32 %v736, %v962
        %964 = vmatprep.mubr.bf16.mxu0 %v847
        %965 = vmatmul.mubr.bf16.gmra.mrb[0].mxu0 %v846
        %v966 = vpop.f32.mrb[0].mxu0
        %v967 = vadd.f32 %v737, %v966
        %v968 = vpop.f32.mrb[0].mxu0
        %v969 = vadd.f32 %v738, %v968
        %v970 = vpop.f32.mrb[0].mxu0
        %v971 = vadd.f32 %v739, %v970
        %v972 = vpop.f32.mrb[0].mxu0
        %v973 = vadd.f32 %v740, %v972
        %974 = vmatprep.mubr.bf16.mxu0 %v850
        %975 = vmatmul.mubr.bf16.gmra.mrb[0].mxu0 %v849
        %v976 = vpop.f32.mrb[0].mxu0
        %v977 = vadd.f32 %v741, %v976
        %v978 = vpop.f32.mrb[0].mxu0
        %v979 = vadd.f32 %v742, %v978
        %v980 = vpop.f32.mrb[0].mxu0
        %v981 = vadd.f32 %v743, %v980
        %v982 = vpop.f32.mrb[0].mxu0
        %v983 = vadd.f32 %v744, %v982
        %984 = vmatprep.mubr.bf16.mxu0 %v853
        %985 = vmatmul.mubr.bf16.gmra.mrb[0].mxu0 %v852
        %v986 = vpop.f32.mrb[0].mxu0
        %v987 = vadd.f32 %v745, %v986
        %v988 = vpop.f32.mrb[0].mxu0
        %v989 = vadd.f32 %v746, %v988
        %v990 = vpop.f32.mrb[0].mxu0
        %v991 = vadd.f32 %v747, %v990
        %v992 = vpop.f32.mrb[0].mxu0
        %v993 = vadd.f32 %v748, %v992
        %994 = vmatprep.mubr.bf16.mxu0 %v856
        %995 = vmatmul.mubr.bf16.gmra.mrb[0].mxu0 %v855
        %v996 = vpop.f32.mrb[0].mxu0
        %v997 = vadd.f32 %v749, %v996
        %v998 = vpop.f32.mrb[0].mxu0
        %v999 = vadd.f32 %v750, %v998
        %v1000 = vpop.f32.mrb[0].mxu0
        %v1001 = vadd.f32 %v751, %v1000
        %v1002 = vpop.f32.mrb[0].mxu0
        %v1003 = vadd.f32 %v752, %v1002
        %1004 = vmatprep.mubr.bf16.mxu0 %v859
        %1005 = vmatmul.mubr.bf16.gmra.mrb[0].mxu0 %v858
        %v1006 = vpop.f32.mrb[0].mxu0
        %v1007 = vadd.f32 %v753, %v1006
        %v1008 = vpop.f32.mrb[0].mxu0
        %v1009 = vadd.f32 %v754, %v1008
        %v1010 = vpop.f32.mrb[0].mxu0
        %v1011 = vadd.f32 %v755, %v1010
        %v1012 = vpop.f32.mrb[0].mxu0
        %v1013 = vadd.f32 %v756, %v1012
        %1014 = vdwg.mxu0
        %1015 = vmatprep.subr.bf16.mxu0 %v690
        %1016 = vmatpush1.bf16.msra.mxu0 %v689
        %1017 = vmatprep.subr.bf16.mxu0 %v692
        %1018 = vmatpush1.bf16.msra.mxu0 %v691
        %1019 = vmatprep.subr.bf16.mxu0 0
        %1020 = vmatpush1.bf16.msra.mxu0 0
        %1021 = vmatprep.subr.bf16.mxu0 0
        %1022 = vmatpush1.bf16.msra.mxu0 0
        %1023 = vmatprep.subr.bf16.mxu0 0
        %1024 = vmatpush1.bf16.msra.mxu0 0
        %1025 = vmatprep.subr.bf16.mxu0 0
        %1026 = vmatpush1.bf16.msra.mxu0 0
        %1027 = vmatprep.subr.bf16.mxu0 0
        %1028 = vmatpush1.bf16.msra.mxu0 0
        %1029 = vmatprep.subr.bf16.mxu0 0
        %1030 = vmatpush1.bf16.msra.mxu0 0
        %1031 = vmatprep.subr.bf16.mxu0 0
        %1032 = vmatpush1.bf16.msra.mxu0 0
        %1033 = vmatprep.subr.bf16.mxu0 0
        %1034 = vmatpush1.bf16.msra.mxu0 0
        %1035 = vmatprep.subr.bf16.mxu0 0
        %1036 = vmatpush1.bf16.msra.mxu0 0
        %1037 = vmatprep.subr.bf16.mxu0 0
        %1038 = vmatpush1.bf16.msra.mxu0 0
        %1039 = vmatprep.subr.bf16.mxu0 0
        %1040 = vmatpush1.bf16.msra.mxu0 0
        %1041 = vmatprep.subr.bf16.mxu0 0
        %1042 = vmatpush1.bf16.msra.mxu0 0
        %1043 = vmatprep.subr.bf16.mxu0 0
        %1044 = vmatpush1.bf16.msra.mxu0 0
        %1045 = vmatprep.subr.bf16.mxu0 0
        %1046 = vmatpush1.bf16.msra.mxu0 0
        %1047 = vmatprep.mubr.bf16.mxu0 0
        %1048 = vmatmul.mubr.bf16.gmra.mrb[0].mxu0 %v879
        %v1049 = vpop.f32.mrb[0].mxu0
        %v1050 = vadd.f32 %v937, %v1049
        %v1051 = vpop.f32.mrb[0].mxu0
        %v1052 = vadd.f32 %v939, %v1051
        %v1053 = vpop.f32.mrb[0].mxu0
        %v1054 = vadd.f32 %v941, %v1053
        %v1055 = vpop.f32.mrb[0].mxu0
        %v1056 = vadd.f32 %v943, %v1055
        %1057 = vmatprep.mubr.bf16.mxu0 0
        %1058 = vmatmul.mubr.bf16.gmra.mrb[0].mxu0 %v882
        %v1059 = vpop.f32.mrb[0].mxu0
        %v1060 = vadd.f32 %v947, %v1059
        %v1061 = vpop.f32.mrb[0].mxu0
        %v1062 = vadd.f32 %v949, %v1061
        %v1063 = vpop.f32.mrb[0].mxu0
        %v1064 = vadd.f32 %v951, %v1063
        %v1065 = vpop.f32.mrb[0].mxu0
        %v1066 = vadd.f32 %v953, %v1065
        %1067 = vmatprep.mubr.bf16.mxu0 0
        %1068 = vmatmul.mubr.bf16.gmra.mrb[0].mxu0 %v885
        %v1069 = vpop.f32.mrb[0].mxu0
        %v1070 = vadd.f32 %v957, %v1069
        %v1071 = vpop.f32.mrb[0].mxu0
        %v1072 = vadd.f32 %v959, %v1071
        %v1073 = vpop.f32.mrb[0].mxu0
        %v1074 = vadd.f32 %v961, %v1073
        %v1075 = vpop.f32.mrb[0].mxu0
        %v1076 = vadd.f32 %v963, %v1075
        %1077 = vmatprep.mubr.bf16.mxu0 0
        %1078 = vmatmul.mubr.bf16.gmra.mrb[0].mxu0 %v888
        %v1079 = vpop.f32.mrb[0].mxu0
        %v1080 = vadd.f32 %v967, %v1079
        %v1081 = vpop.f32.mrb[0].mxu0
        %v1082 = vadd.f32 %v969, %v1081
        %v1083 = vpop.f32.mrb[0].mxu0
        %v1084 = vadd.f32 %v971, %v1083
        %v1085 = vpop.f32.mrb[0].mxu0
        %v1086 = vadd.f32 %v973, %v1085
        %1087 = vmatprep.mubr.bf16.mxu0 0
        %1088 = vmatmul.mubr.bf16.gmra.mrb[0].mxu0 %v891
        %v1089 = vpop.f32.mrb[0].mxu0
        %v1090 = vadd.f32 %v977, %v1089
        %v1091 = vpop.f32.mrb[0].mxu0
        %v1092 = vadd.f32 %v979, %v1091
        %v1093 = vpop.f32.mrb[0].mxu0
        %v1094 = vadd.f32 %v981, %v1093
        %v1095 = vpop.f32.mrb[0].mxu0
        %v1096 = vadd.f32 %v983, %v1095
        %1097 = vmatprep.mubr.bf16.mxu0 0
        %1098 = vmatmul.mubr.bf16.gmra.mrb[0].mxu0 %v894
        %v1099 = vpop.f32.mrb[0].mxu0
        %v1100 = vadd.f32 %v987, %v1099
        %v1101 = vpop.f32.mrb[0].mxu0
        %v1102 = vadd.f32 %v989, %v1101
        %v1103 = vpop.f32.mrb[0].mxu0
        %v1104 = vadd.f32 %v991, %v1103
        %v1105 = vpop.f32.mrb[0].mxu0
        %v1106 = vadd.f32 %v993, %v1105
        %1107 = vmatprep.mubr.bf16.mxu0 0
        %1108 = vmatmul.mubr.bf16.gmra.mrb[0].mxu0 %v897
        %v1109 = vpop.f32.mrb[0].mxu0
        %v1110 = vadd.f32 %v997, %v1109
        %v1111 = vpop.f32.mrb[0].mxu0
        %v1112 = vadd.f32 %v999, %v1111
        %v1113 = vpop.f32.mrb[0].mxu0
        %v1114 = vadd.f32 %v1001, %v1113
        %v1115 = vpop.f32.mrb[0].mxu0
        %v1116 = vadd.f32 %v1003, %v1115
        %1117 = vmatprep.mubr.bf16.mxu0 0
        %1118 = vmatmul.mubr.bf16.gmra.mrb[0].mxu0 %v900
        %v1119 = vpop.f32.mrb[0].mxu0
        %v1120 = vadd.f32 %v1007, %v1119
        %v1121 = vpop.f32.mrb[0].mxu0
        %v1122 = vadd.f32 %v1009, %v1121
        %v1123 = vpop.f32.mrb[0].mxu0
        %v1124 = vadd.f32 %v1011, %v1123
        %v1125 = vpop.f32.mrb[0].mxu0
        %v1126 = vadd.f32 %v1013, %v1125
        %1127 = vdwg.mxu0
        %v1128 = vxor.u32 %v1050, 2147483648
        %v1129 = vxor.u32 %v1052, 2147483648
        %v1130 = vxor.u32 %v1054, 2147483648
        %v1131 = vxor.u32 %v1056, 2147483648
        %v1132 = vxor.u32 %v1060, 2147483648
        %v1133 = vxor.u32 %v1062, 2147483648
        %v1134 = vxor.u32 %v1064, 2147483648
        %v1135 = vxor.u32 %v1066, 2147483648
        %v1136 = vmul.f32 %v1128, 1.442695
        %v1137 = vpow.pop %v1136
        %v1138 = vmul.f32 %v1129, 1.442695
        %v1139 = vpow.pop %v1138
        %v1140 = vmul.f32 %v1130, 1.442695
        %v1141 = vpow.pop %v1140
        %v1142 = vmul.f32 %v1131, 1.442695
        %v1143 = vpow.pop %v1142
        %v1144 = vmul.f32 %v1132, 1.442695
        %v1145 = vpow.pop %v1144
        %v1146 = vmul.f32 %v1133, 1.442695
        %v1147 = vpow.pop %v1146
        %v1148 = vmul.f32 %v1134, 1.442695
        %v1149 = vpow.pop %v1148
        %v1150 = vmul.f32 %v1135, 1.442695
        %v1151 = vpow.pop %v1150
        %v1152 = vadd.f32 %v1137, 1.0
        %v1153 = vadd.f32 %v1139, 1.0
        %v1154 = vadd.f32 %v1141, 1.0
        %v1155 = vadd.f32 %v1143, 1.0
        %v1156 = vadd.f32 %v1145, 1.0
        %v1157 = vadd.f32 %v1147, 1.0
        %v1158 = vadd.f32 %v1149, 1.0
        %v1159 = vadd.f32 %v1151, 1.0
        %v1160 = vrcp.pop %v1152
        %v1161 = vmul.f32 1.0, %v1160
        %v1162 = vrcp.pop %v1153
        %v1163 = vmul.f32 1.0, %v1162
        %v1164 = vrcp.pop %v1154
        %v1165 = vmul.f32 1.0, %v1164
        %v1166 = vrcp.pop %v1155
        %v1167 = vmul.f32 1.0, %v1166
        %v1168 = vrcp.pop %v1156
        %v1169 = vmul.f32 1.0, %v1168
        %v1170 = vrcp.pop %v1157
        %v1171 = vmul.f32 1.0, %v1170
        %v1172 = vrcp.pop %v1158
        %v1173 = vmul.f32 1.0, %v1172
        %v1174 = vrcp.pop %v1159
        %v1175 = vmul.f32 1.0, %v1174
        %v1176 = vxor.u32 %v1070, 2147483648
        %v1177 = vxor.u32 %v1072, 2147483648
        %v1178 = vxor.u32 %v1074, 2147483648
        %v1179 = vxor.u32 %v1076, 2147483648
        %v1180 = vxor.u32 %v1080, 2147483648
        %v1181 = vxor.u32 %v1082, 2147483648
        %v1182 = vxor.u32 %v1084, 2147483648
        %v1183 = vxor.u32 %v1086, 2147483648
        %v1184 = vmul.f32 %v1176, 1.442695
        %v1185 = vpow.pop %v1184
        %v1186 = vmul.f32 %v1177, 1.442695
        %v1187 = vpow.pop %v1186
        %v1188 = vmul.f32 %v1178, 1.442695
        %v1189 = vpow.pop %v1188
        %v1190 = vmul.f32 %v1179, 1.442695
        %v1191 = vpow.pop %v1190
        %v1192 = vmul.f32 %v1180, 1.442695
        %v1193 = vpow.pop %v1192
        %v1194 = vmul.f32 %v1181, 1.442695
        %v1195 = vpow.pop %v1194
        %v1196 = vmul.f32 %v1182, 1.442695
        %v1197 = vpow.pop %v1196
        %v1198 = vmul.f32 %v1183, 1.442695
        %v1199 = vpow.pop %v1198
        %v1200 = vadd.f32 %v1185, 1.0
        %v1201 = vadd.f32 %v1187, 1.0
        %v1202 = vadd.f32 %v1189, 1.0
        %v1203 = vadd.f32 %v1191, 1.0
        %v1204 = vadd.f32 %v1193, 1.0
        %v1205 = vadd.f32 %v1195, 1.0
        %v1206 = vadd.f32 %v1197, 1.0
        %v1207 = vadd.f32 %v1199, 1.0
        %v1208 = vrcp.pop %v1200
        %v1209 = vmul.f32 1.0, %v1208
        %v1210 = vrcp.pop %v1201
        %v1211 = vmul.f32 1.0, %v1210
        %v1212 = vrcp.pop %v1202
        %v1213 = vmul.f32 1.0, %v1212
        %v1214 = vrcp.pop %v1203
        %v1215 = vmul.f32 1.0, %v1214
        %v1216 = vrcp.pop %v1204
        %v1217 = vmul.f32 1.0, %v1216
        %v1218 = vrcp.pop %v1205
        %v1219 = vmul.f32 1.0, %v1218
        %v1220 = vrcp.pop %v1206
        %v1221 = vmul.f32 1.0, %v1220
        %v1222 = vrcp.pop %v1207
        %v1223 = vmul.f32 1.0, %v1222
        %v1224 = vxor.u32 %v1090, 2147483648
        %v1225 = vxor.u32 %v1092, 2147483648
        %v1226 = vxor.u32 %v1094, 2147483648
        %v1227 = vxor.u32 %v1096, 2147483648
        %v1228 = vxor.u32 %v1100, 2147483648
        %v1229 = vxor.u32 %v1102, 2147483648
        %v1230 = vxor.u32 %v1104, 2147483648
        %v1231 = vxor.u32 %v1106, 2147483648
        %v1232 = vmul.f32 %v1224, 1.442695
        %v1233 = vpow.pop %v1232
        %v1234 = vmul.f32 %v1225, 1.442695
        %v1235 = vpow.pop %v1234
        %v1236 = vmul.f32 %v1226, 1.442695
        %v1237 = vpow.pop %v1236
        %v1238 = vmul.f32 %v1227, 1.442695
        %v1239 = vpow.pop %v1238
        %v1240 = vmul.f32 %v1228, 1.442695
        %v1241 = vpow.pop %v1240
        %v1242 = vmul.f32 %v1229, 1.442695
        %v1243 = vpow.pop %v1242
        %v1244 = vmul.f32 %v1230, 1.442695
        %v1245 = vpow.pop %v1244
        %v1246 = vmul.f32 %v1231, 1.442695
        %v1247 = vpow.pop %v1246
        %v1248 = vadd.f32 %v1233, 1.0
        %v1249 = vadd.f32 %v1235, 1.0
        %v1250 = vadd.f32 %v1237, 1.0
        %v1251 = vadd.f32 %v1239, 1.0
        %v1252 = vadd.f32 %v1241, 1.0
        %v1253 = vadd.f32 %v1243, 1.0
        %v1254 = vadd.f32 %v1245, 1.0
        %v1255 = vadd.f32 %v1247, 1.0
        %v1256 = vrcp.pop %v1248
        %v1257 = vmul.f32 1.0, %v1256
        %v1258 = vrcp.pop %v1249
        %v1259 = vmul.f32 1.0, %v1258
        %v1260 = vrcp.pop %v1250
        %v1261 = vmul.f32 1.0, %v1260
        %v1262 = vrcp.pop %v1251
        %v1263 = vmul.f32 1.0, %v1262
        %v1264 = vrcp.pop %v1252
        %v1265 = vmul.f32 1.0, %v1264
        %v1266 = vrcp.pop %v1253
        %v1267 = vmul.f32 1.0, %v1266
        %v1268 = vrcp.pop %v1254
        %v1269 = vmul.f32 1.0, %v1268
        %v1270 = vrcp.pop %v1255
        %v1271 = vmul.f32 1.0, %v1270
        %v1272 = vtanh.pop %v1110
        %v1273 = vtanh.pop %v1112
        %v1274 = vtanh.pop %v1114
        %v1275 = vtanh.pop %v1116
        %v1276 = vtanh.pop %v1120
        %v1277 = vtanh.pop %v1122
        %v1278 = vtanh.pop %v1124
        %v1279 = vtanh.pop %v1126
        %v1280 = vld [vmem:[#allocation3] sm:$0xff]
        %v1281 = vld [vmem:[#allocation3 + $0x8] sm:$0xff]
        %v1282 = vld [vmem:[#allocation3 + $0x10] sm:$0xff]
        %v1283 = vld [vmem:[#allocation3 + $0x18] sm:$0xff]
        %v1284 = vld [vmem:[#allocation3 + $0x20] sm:$0xff]
        %v1285 = vld [vmem:[#allocation3 + $0x28] sm:$0xff]
        %v1286 = vld [vmem:[#allocation3 + $0x30] sm:$0xff]
        %v1287 = vld [vmem:[#allocation3 + $0x38] sm:$0xff]
        %v1288 = vmul.f32 %v1209, %v1280
        %v1289 = vmul.f32 %v1211, %v1281
        %v1290 = vmul.f32 %v1213, %v1282
        %v1291 = vmul.f32 %v1215, %v1283
        %v1292 = vmul.f32 %v1217, %v1284
        %v1293 = vmul.f32 %v1219, %v1285
        %v1294 = vmul.f32 %v1221, %v1286
        %v1295 = vmul.f32 %v1223, %v1287
        %v1296 = vmul.f32 %v1161, %v1272
        %v1297 = vmul.f32 %v1163, %v1273
        %v1298 = vmul.f32 %v1165, %v1274
        %v1299 = vmul.f32 %v1167, %v1275
        %v1300 = vmul.f32 %v1169, %v1276
        %v1301 = vmul.f32 %v1171, %v1277
        %v1302 = vmul.f32 %v1173, %v1278
        %v1303 = vmul.f32 %v1175, %v1279
        %v1304 = vadd.f32 %v1288, %v1296
        %v1305 = vadd.f32 %v1289, %v1297
        %v1306 = vadd.f32 %v1290, %v1298
        %v1307 = vadd.f32 %v1291, %v1299
        %v1308 = vadd.f32 %v1292, %v1300
        %v1309 = vadd.f32 %v1293, %v1301
        %v1310 = vadd.f32 %v1294, %v1302
        %v1311 = vadd.f32 %v1295, %v1303
        %v1312 = vtanh.pop %v1304
        %v1313 = vtanh.pop %v1305
        %v1314 = vtanh.pop %v1306
        %v1315 = vtanh.pop %v1307
        %v1316 = vtanh.pop %v1308
        %v1317 = vtanh.pop %v1309
        %v1318 = vtanh.pop %v1310
        %v1319 = vtanh.pop %v1311
        %v1320 = vmul.f32 %v1257, %v1312
        %v1321 = vmul.f32 %v1259, %v1313
        %v1322 = vmul.f32 %v1261, %v1314
        %v1323 = vmul.f32 %v1263, %v1315
        %v1324 = vmul.f32 %v1265, %v1316
        %v1325 = vmul.f32 %v1267, %v1317
        %v1326 = vmul.f32 %v1269, %v1318
        %v1327 = vmul.f32 %v1271, %v1319
        %1328 = vst [vmem:[#allocation3] sm:$0xff] %v1304
        %1329 = vst [vmem:[#allocation3 + $0x8] sm:$0xff] %v1305
        %1330 = vst [vmem:[#allocation3 + $0x10] sm:$0xff] %v1306
        %1331 = vst [vmem:[#allocation3 + $0x18] sm:$0xff] %v1307
        %1332 = vst [vmem:[#allocation3 + $0x20] sm:$0xff] %v1308
        %1333 = vst [vmem:[#allocation3 + $0x28] sm:$0xff] %v1309
        %1334 = vst [vmem:[#allocation3 + $0x30] sm:$0xff] %v1310
        %1335 = vst [vmem:[#allocation3 + $0x38] sm:$0xff] %v1311
        %1336 = vst [vmem:[#allocation2] sm:$0xff] %v1320
        %1337 = vst [vmem:[#allocation2 + $0x8] sm:$0xff] %v1321
        %1338 = vst [vmem:[#allocation2 + $0x10] sm:$0xff] %v1322
        %1339 = vst [vmem:[#allocation2 + $0x18] sm:$0xff] %v1323
        %1340 = vst [vmem:[#allocation2 + $0x20] sm:$0xff] %v1324
        %1341 = vst [vmem:[#allocation2 + $0x28] sm:$0xff] %v1325
        %1342 = vst [vmem:[#allocation2 + $0x30] sm:$0xff] %v1326
        %1343 = vst [vmem:[#allocation2 + $0x38] sm:$0xff] %v1327
        %1344 = vst [vmem:[%s279] sm:$0xff] %v1320
        %1345 = vst [vmem:[%s279 + $0x8] sm:$0xff] %v1321
        %1346 = vst [vmem:[%s279 + $0x10] sm:$0xff] %v1322
        %1347 = vst [vmem:[%s279 + $0x18] sm:$0xff] %v1323
        %1348 = vst [vmem:[%s279 + $0x20] sm:$0xff] %v1324
        %1349 = vst [vmem:[%s279 + $0x28] sm:$0xff] %v1325
        %1350 = vst [vmem:[%s279 + $0x30] sm:$0xff] %v1326
        %1351 = vst [vmem:[%s279 + $0x38] sm:$0xff] %v1327
        %p1352 = scmp.eq.s32.totalorder %s32, 7
        // Predicated region
        $region45: #{tpu_custom_call.1} parent=31 // pred_check
          %p1353 = pneg %p1352
        $region46: #{tpu_custom_call.1} parent=31 // pred_check_branch
          %1355 = sbr.rel (%p1353) target = $region48
        $region47: #{tpu_custom_call.1} parent=31 // pred_region
          %1356 = vst [vmem:[%s286] sm:$0xff] %v1320
          %1357 = vst [vmem:[%s286 + $0x8] sm:$0xff] %v1321
          %1358 = vst [vmem:[%s286 + $0x10] sm:$0xff] %v1322
          %1359 = vst [vmem:[%s286 + $0x18] sm:$0xff] %v1323
          %1360 = vst [vmem:[%s286 + $0x20] sm:$0xff] %v1324
          %1361 = vst [vmem:[%s286 + $0x28] sm:$0xff] %v1325
          %1362 = vst [vmem:[%s286 + $0x30] sm:$0xff] %v1326
          %1363 = vst [vmem:[%s286 + $0x38] sm:$0xff] %v1327
          %1364 = vst [vmem:[%s293] sm:$0xff] %v1304
          %1365 = vst [vmem:[%s293 + $0x8] sm:$0xff] %v1305
          %1366 = vst [vmem:[%s293 + $0x10] sm:$0xff] %v1306
          %1367 = vst [vmem:[%s293 + $0x18] sm:$0xff] %v1307
          %1368 = vst [vmem:[%s293 + $0x20] sm:$0xff] %v1308
          %1369 = vst [vmem:[%s293 + $0x28] sm:$0xff] %v1309
          %1370 = vst [vmem:[%s293 + $0x30] sm:$0xff] %v1310
          %1371 = vst [vmem:[%s293 + $0x38] sm:$0xff] %v1311
        $region48: #{tpu_custom_call.1} parent=31 // pred_fallthru
          _
        %s1372 = sand.u32 %s119, 1
        %s1373 = scalar_lea.sflag [#allocation6], %s1372
        %s1374 = sand.u32 %s119, 1
        %s1375 = smul.addr %s1374, 64
        %s1376 = scalar_lea.vmem [#allocation9], %s1375
        %s1377 = sand.u32 %s27, 1
        %s1378 = scalar_lea.sflag [#allocation11], %s1377
        %s1379 = sand.u32 %s145, 1
        %s1380 = smul.addr %s1379, 64
        %s1381 = scalar_lea.vmem [#allocation10], %s1380
        %s1382 = sand.u32 %s27, 1
        %s1383 = scalar_lea.sflag [#allocation11], %s1382
        %s1384 = sand.u32 %s171, 1
        %s1385 = smul.addr %s1384, 64
        %s1386 = scalar_lea.vmem [#allocation12], %s1385
        // Predicated region
        $region49: #{tpu_custom_call.1} parent=31 // pred_check
          %p1387 = pneg %p129
        $region50: #{tpu_custom_call.1} parent=31 // pred_check_branch
          %1389 = sbr.rel (%p1387) target = $region52
        $region51: #{tpu_custom_call.1} parent=31 // pred_region
          %s1391 = ssub.s32 1024, 1024
          %1392 = vsyncadd %s1373, %s1391
          %s1393 = smul.addr %s32, 8
          %s1394 = smul.addr %s31, 64
          %s1395 = sadd.s32 %s1393, %s1394
          %s1396 = smul.addr %s1395, 128
          %s1397 = scalar_lea.hbm %s3, %s1396
          %s1398 = sshll.u32 %s1376, 4
          %s1399 = int_to_ptr.vmem [resolvable:$true] %s1398
          %1404 = dma.vmem_to_hbm [thread:$0]  %s1399, 1024, %s1397, %s1373, 256, 256, 16
        $region52: #{tpu_custom_call.1} parent=31 // pred_fallthru
          _
        // Predicated region
        $region53: #{tpu_custom_call.1} parent=31 // pred_check
          %p1405 = pneg %p155
        $region54: #{tpu_custom_call.1} parent=31 // pred_check_branch
          %1407 = sbr.rel (%p1405) target = $region56
        $region55: #{tpu_custom_call.1} parent=31 // pred_region
          %s1409 = ssub.s32 1024, 1024
          %1410 = vsyncadd %s1378, %s1409
          %s1411 = smul.addr %s31, 8
          %s1412 = smul.addr %s1411, 128
          %s1413 = scalar_lea.hbm %s4, %s1412
          %s1414 = sshll.u32 %s1381, 4
          %s1415 = int_to_ptr.vmem [resolvable:$true] %s1414
          %1420 = dma.vmem_to_hbm [thread:$0]  %s1415, 1024, %s1413, %s1378, 256, 256, 16
        $region56: #{tpu_custom_call.1} parent=31 // pred_fallthru
          _
        // Predicated region
        $region57: #{tpu_custom_call.1} parent=31 // pred_check
          %p1421 = pneg %p181
        $region58: #{tpu_custom_call.1} parent=31 // pred_check_branch
          %1423 = sbr.rel (%p1421) target = $region60
        $region59: #{tpu_custom_call.1} parent=31 // pred_region
          %s1425 = ssub.s32 1024, 1024
          %1426 = vsyncadd %s1383, %s1425
          %s1427 = smul.addr %s31, 8
          %s1428 = smul.addr %s1427, 128
          %s1429 = scalar_lea.hbm %s5, %s1428
          %s1430 = sshll.u32 %s1386, 4
          %s1431 = int_to_ptr.vmem [resolvable:$true] %s1430
          %1436 = dma.vmem_to_hbm [thread:$0]  %s1431, 1024, %s1429, %s1383, 256, 256, 16
        $region60: #{tpu_custom_call.1} parent=31 // pred_fallthru
          _
      $region32: #{tpu_custom_call.1} parent=5 // pred_fallthru
        _
      %p1437 = scmp.le.s32.totalorder 2, %s22
      // Predicated region
      $region61: #{tpu_custom_call.1} parent=5 // pred_check
        %p1438 = pneg %p1437
      $region62: #{tpu_custom_call.1} parent=5 // pred_check_branch
        %1440 = sbr.rel (%p1438) target = $region64
      $region63: #{tpu_custom_call.1} parent=5 // pred_region
        %s1441 = ssub.s32 %s22, 2
        // Predicated region
        $region65: #{tpu_custom_call.1} parent=63 // pred_check
          %p1442 = pneg %p135
        $region66: #{tpu_custom_call.1} parent=63 // pred_check_branch
          %1444 = sbr.rel (%p1442) target = $region68
        $region67: #{tpu_custom_call.1} parent=63 // pred_region
          %s1445 = sand.u32 %s120, 1
          %s1446 = scalar_lea.sflag [#allocation6], %s1445
          %s1447 = sand.u32 %s120, 1
          %s1448 = smul.addr %s1447, 64
          %s1449 = scalar_lea.vmem [#allocation9], %s1448
          %1450 = dma.done %s1446, 1024
        $region68: #{tpu_custom_call.1} parent=63 // pred_fallthru
          _
        // Predicated region
        $region69: #{tpu_custom_call.1} parent=63 // pred_check
          %p1451 = pneg %p161
        $region70: #{tpu_custom_call.1} parent=63 // pred_check_branch
          %1453 = sbr.rel (%p1451) target = $region72
        $region71: #{tpu_custom_call.1} parent=63 // pred_region
          %s1454 = sand.u32 %s28, 1
          %s1455 = scalar_lea.sflag [#allocation11], %s1454
          %s1456 = sand.u32 %s146, 1
          %s1457 = smul.addr %s1456, 64
          %s1458 = scalar_lea.vmem [#allocation10], %s1457
          %1459 = dma.done %s1455, 1024
        $region72: #{tpu_custom_call.1} parent=63 // pred_fallthru
          _
        // Predicated region
        $region73: #{tpu_custom_call.1} parent=63 // pred_check
          %p1460 = pneg %p187
        $region74: #{tpu_custom_call.1} parent=63 // pred_check_branch
          %1462 = sbr.rel (%p1460) target = $region76
        $region75: #{tpu_custom_call.1} parent=63 // pred_region
          %s1463 = sand.u32 %s28, 1
          %s1464 = scalar_lea.sflag [#allocation11], %s1463
          %s1465 = sand.u32 %s172, 1
          %s1466 = smul.addr %s1465, 64
          %s1467 = scalar_lea.vmem [#allocation12], %s1466
          %1468 = dma.done %s1464, 1024
        $region76: #{tpu_custom_call.1} parent=63 // pred_fallthru
          _
      $region64: #{tpu_custom_call.1} parent=5 // pred_fallthru
        _
    $region6: #{tpu_custom_call.1} parent=1 // loop_footer
      %s26 = sadd.s32 1, %s22
    $region7: #{tpu_custom_call.1} parent=1 // loop_footer_branch
      %21 = sbr.rel target = $region3
    $region8: #{tpu_custom_call.1} parent=1 // loop_exit
      _
    %1469 = vsyncpa [#allocation5], 1
    %s1470 = scalar_lea.sflag [#allocation5], 1
    %1471 = vsyncpa %s1470, 1
    %1472 = vsyncpa [#allocation8], 1
    %1473 = vsyncpa [#allocation6], 1
    %s1474 = scalar_lea.sflag [#allocation6], 1
    %1475 = vsyncpa %s1474, 1
    %1476 = vsyncpa [#allocation11], 1
    %s1477 = scalar_lea.sflag [#allocation11], 1
    %1478 = vsyncpa %s1477, 1

</llo_original>
